<compile_context>
chip_gen: v7x
topology: tpu7x:2x2x1
jax: 0.10.0
libtpu: 0.0.40
codegen_flags: <defaults>
</compile_context>

<pallas_src>
import jax
import jax.numpy as jnp
from jax.experimental import pallas as pl
from jax.experimental.pallas import tpu as pltpu

INPUT_SIZE = 6    # nn.LSTM input_size (the module's "seq_length" arg)
HIDDEN = 10       # hidden_dim
T_STEPS = 8       # number of timesteps in the example input
LANE = 128        # per-gate padded lane-block width (one vreg lane span)


def lstm_mlp_kernel(x_ref, wih_ref, whh_ref, b_ref,
                    w1_ref, b1_ref, w2_ref, b2_ref, w3_ref, b3_ref,
                    out_ref):
    """Whole forward pass: LSTM recurrence + 3-layer ReLU MLP head."""
    T = x_ref.shape[0]

    # --- Hoisted input projection + bias: one MXU matmul for all timesteps.
    gx = (jnp.dot(x_ref[...], wih_ref[...],
                  preferred_element_type=jnp.float32)
          + b_ref[...])                                # (T, 4*LANE)

    whh = whh_ref[...]                                 # (LANE, 4*LANE)

    h = jnp.zeros((1, LANE), jnp.float32)
    c = jnp.zeros((1, LANE), jnp.float32)

    # --- Fully unrolled recurrence (T is a static Python int): per step one
    #     MXU matmul, one EUP sigmoid pass, a handful of VPU fma/mul ops.
    for t in range(T):
        gates = gx[t:t + 1, :] + jnp.dot(
            h, whh, preferred_element_type=jnp.float32)        # (1, 4*LANE)
        s = jax.nn.sigmoid(gates)       # single EUP pass over all four gates
        i_g = s[:, 0 * LANE:1 * LANE]                          # sigmoid(i)
        f_g = s[:, 1 * LANE:2 * LANE]                          # sigmoid(f)
        g_g = 2.0 * s[:, 2 * LANE:3 * LANE] - 1.0              # tanh(g) (g pre-scaled x2)
        o_g = s[:, 3 * LANE:4 * LANE]                          # sigmoid(o)
        c = f_g * c + i_g * g_g
        h = o_g * jnp.tanh(c)

    # --- MLP head (ReLU after every linear, as in the PyTorch forward).
    y = jnp.maximum(
        jnp.dot(h, w1_ref[...], preferred_element_type=jnp.float32)
        + b1_ref[...], 0.0)                                    # (1, 5)
    y = jnp.maximum(
        jnp.dot(y, w2_ref[...], preferred_element_type=jnp.float32)
        + b2_ref[...], 0.0)                                    # (1, 3)
    # Final 3->1 projection as a lane reduction (avoids a last-dim-1 matmul).
    y = jnp.sum(y * w3_ref[...], axis=-1, keepdims=True) + b3_ref[...]
    out_ref[...] = jnp.maximum(y, 0.0)                         # (1, 1)


def my_lstm_forward(x, kernel_params):
    """x: (T, INPUT_SIZE) float32 -> (1, 1) float32."""
    vmem = pl.BlockSpec(memory_space=pltpu.MemorySpace.VMEM)
    return pl.pallas_call(
        lstm_mlp_kernel,
        out_shape=jax.ShapeDtypeStruct((1, 1), jnp.float32),
        in_specs=[vmem] * 10,
        out_specs=vmem,
    )(x, *kernel_params)


def init_params(key):
    """Deterministic synthetic parameters in PyTorch layout."""
    ks = jax.random.split(key, 10)
    H, I = HIDDEN, INPUT_SIZE
    k_lstm = 1.0 / jnp.sqrt(float(H))

    def u(k, shape, bound):
        return jax.random.uniform(k, shape, jnp.float32, -bound, bound)

    w_ih = u(ks[0], (4 * H, I), k_lstm)              # nn.LSTM weight_ih_l0
    w_hh = u(ks[1], (4 * H, H), k_lstm)              # nn.LSTM weight_hh_l0
    b_ih = u(ks[2], (4 * H,), k_lstm)
    b_hh = u(ks[3], (4 * H,), k_lstm)
    w1 = u(ks[4], (5, H), 1.0 / jnp.sqrt(float(H)))  # Linear(10 -> 5)
    b1 = u(ks[5], (5,), 1.0 / jnp.sqrt(float(H)))
    w2 = u(ks[6], (3, 5), 1.0 / jnp.sqrt(5.0))       # Linear(5 -> 3)
    b2 = u(ks[7], (3,), 1.0 / jnp.sqrt(5.0))
    w3 = u(ks[8], (1, 3), 1.0 / jnp.sqrt(3.0))       # Linear(3 -> 1)
    b3 = u(ks[9], (1,), 1.0 / jnp.sqrt(3.0))
    return (w_ih, w_hh, b_ih, b_hh, w1, b1, w2, b2, w3, b3)


def prepare_kernel_params(raw):
    """Transpose + lane-pad gates (each gate -> its own 128-lane block) and
    pre-scale the g-gate columns by 2 (tanh(g) = 2*sigmoid(2g) - 1)."""
    (w_ih, w_hh, b_ih, b_hh, w1, b1, w2, b2, w3, b3) = raw
    H = HIDDEN

    def gate_pad(w_t):
        # w_t: (rows, 4H)  ->  (rows, 4*LANE); PyTorch gate order (i,f,g,o).
        rows = w_t.shape[0]
        out = jnp.zeros((rows, 4 * LANE), jnp.float32)
        for k in range(4):
            blk = w_t[:, k * H:(k + 1) * H]
            if k == 2:                      # g gate: pre-scale by 2
                blk = 2.0 * blk
            out = out.at[:, k * LANE:k * LANE + H].set(blk)
        return out

    wih_p = gate_pad(jnp.asarray(w_ih.T))                      # (I, 4*LANE)
    whh_p = jnp.zeros((LANE, 4 * LANE), jnp.float32)
    whh_p = whh_p.at[:H, :].set(gate_pad(jnp.asarray(w_hh.T)))  # zero rows for padded h lanes
    b_p = gate_pad((b_ih + b_hh).reshape(1, 4 * H))            # (1, 4*LANE)

    w1_p = jnp.zeros((LANE, 5), jnp.float32).at[:H, :].set(jnp.asarray(w1.T))
    return (
        wih_p, whh_p, b_p,
        w1_p, b1.reshape(1, 5),
        jnp.asarray(w2.T), b2.reshape(1, 3),
        jnp.asarray(w3), b3.reshape(1, 1),
    )


def reference_forward(x, raw):
    """Pure-JAX reference with the *original* LSTM math (unscaled weights,
    separate sigmoid/tanh), used to validate the kernel's rewrites."""
    (w_ih, w_hh, b_ih, b_hh, w1, b1, w2, b2, w3, b3) = raw
    H = HIDDEN
    h = jnp.zeros((1, H), jnp.float32)
    c = jnp.zeros((1, H), jnp.float32)
    b = (b_ih + b_hh).reshape(1, 4 * H)
    for t in range(x.shape[0]):
        gates = x[t:t + 1] @ w_ih.T + h @ w_hh.T + b
        i_g = jax.nn.sigmoid(gates[:, 0 * H:1 * H])
        f_g = jax.nn.sigmoid(gates[:, 1 * H:2 * H])
        g_g = jnp.tanh(gates[:, 2 * H:3 * H])
        o_g = jax.nn.sigmoid(gates[:, 3 * H:4 * H])
        c = f_g * c + i_g * g_g
        h = o_g * jnp.tanh(c)
    y = jnp.maximum(h @ w1.T + b1, 0.0)
    y = jnp.maximum(y @ w2.T + b2, 0.0)
    y = jnp.maximum(y @ w3.T + b3, 0.0)
    return y


if __name__ == "__main__":
    key = jax.random.PRNGKey(0)
    k_x, k_p = jax.random.split(key)
    x = jax.random.normal(k_x, (T_STEPS, INPUT_SIZE), jnp.float32)

    raw_params = init_params(k_p)
    kernel_params = prepare_kernel_params(raw_params)

    out = my_lstm_forward(x, kernel_params)
    out = jax.block_until_ready(out)

    ref = reference_forward(x, raw_params)
    assert out.shape == (1, 1)
    assert jnp.allclose(out, ref, atol=1e-4, rtol=1e-4), (out, ref)
    print("KERNEL_OK")
</pallas_src>

<mosaic_0001>
module attributes {stable_mosaic.version = 11 : i64} {
  func.func @lstm_mlp_kernel(%arg0: memref<8x6xf32, #tpu.memory_space<vmem>>, %arg1: memref<6x512xf32, #tpu.memory_space<vmem>>, %arg2: memref<128x512xf32, #tpu.memory_space<vmem>>, %arg3: memref<1x512xf32, #tpu.memory_space<vmem>>, %arg4: memref<128x5xf32, #tpu.memory_space<vmem>>, %arg5: memref<1x5xf32, #tpu.memory_space<vmem>>, %arg6: memref<5x3xf32, #tpu.memory_space<vmem>>, %arg7: memref<1x3xf32, #tpu.memory_space<vmem>>, %arg8: memref<1x3xf32, #tpu.memory_space<vmem>>, %arg9: memref<1x1xf32, #tpu.memory_space<vmem>>, %arg10: memref<1x1xf32, #tpu.memory_space<vmem>>) attributes {dimension_semantics = [], scalar_prefetch = 0 : i64, scratch_operands = 0 : i64, tpu.core_type = #tpu.core_type<tc>} {
    %c0 = arith.constant 0 : index
    %c0_0 = arith.constant 0 : index
    %0 = vector.load %arg0[%c0, %c0_0] : memref<8x6xf32, #tpu.memory_space<vmem>>, vector<8x6xf32>
    %c0_1 = arith.constant 0 : index
    %c0_2 = arith.constant 0 : index
    %1 = vector.load %arg1[%c0_1, %c0_2] : memref<6x512xf32, #tpu.memory_space<vmem>>, vector<6x512xf32>
    %cst = arith.constant dense<0.000000e+00> : vector<8x512xf32>
    %2 = tpu.matmul %0, %1, %cst {dimension_numbers = #tpu.dot_dimension_numbers<[1], [0], [0], [1], [0, 0, 1, 1], [], []>} : vector<8x6xf32>, vector<6x512xf32>, vector<8x512xf32> -> vector<8x512xf32>
    %c0_3 = arith.constant 0 : index
    %c0_4 = arith.constant 0 : index
    %3 = vector.load %arg3[%c0_3, %c0_4] : memref<1x512xf32, #tpu.memory_space<vmem>>, vector<1x512xf32>
    %4 = vector.broadcast %3 : vector<1x512xf32> to vector<8x512xf32>
    %5 = arith.addf %2, %4 : vector<8x512xf32>
    %c0_5 = arith.constant 0 : index
    %c0_6 = arith.constant 0 : index
    %6 = vector.load %arg2[%c0_5, %c0_6] : memref<128x512xf32, #tpu.memory_space<vmem>>, vector<128x512xf32>
    %cst_7 = arith.constant 0.000000e+00 : f32
    %7 = vector.broadcast %cst_7 : f32 to vector<1x128xf32>
    %cst_8 = arith.constant 0.000000e+00 : f32
    %8 = vector.broadcast %cst_8 : f32 to vector<1x128xf32>
    %9 = vector.extract_strided_slice %5 {offsets = [0, 0], sizes = [1, 512], strides = [1, 1]} : vector<8x512xf32> to vector<1x512xf32>
    %cst_9 = arith.constant dense<0.000000e+00> : vector<1x512xf32>
    %10 = tpu.matmul %7, %6, %cst_9 {dimension_numbers = #tpu.dot_dimension_numbers<[1], [0], [0], [1], [0, 0, 1, 1], [], []>} : vector<1x128xf32>, vector<128x512xf32>, vector<1x512xf32> -> vector<1x512xf32>
    %11 = arith.addf %9, %10 : vector<1x512xf32>
    %12 = arith.negf %11 : vector<1x512xf32>
    %13 = math.exp %12 : vector<1x512xf32>
    %cst_10 = arith.constant 1.000000e+00 : f32
    %14 = vector.broadcast %cst_10 : f32 to vector<1x512xf32>
    %15 = arith.addf %14, %13 : vector<1x512xf32>
    %16 = arith.divf %14, %15 : vector<1x512xf32>
    %17 = vector.extract_strided_slice %16 {offsets = [0, 0], sizes = [1, 128], strides = [1, 1]} : vector<1x512xf32> to vector<1x128xf32>
    %18 = vector.extract_strided_slice %16 {offsets = [0, 128], sizes = [1, 128], strides = [1, 1]} : vector<1x512xf32> to vector<1x128xf32>
    %19 = vector.extract_strided_slice %16 {offsets = [0, 256], sizes = [1, 128], strides = [1, 1]} : vector<1x512xf32> to vector<1x128xf32>
    %cst_11 = arith.constant 2.000000e+00 : f32
    %20 = vector.broadcast %cst_11 : f32 to vector<1x128xf32>
    %21 = arith.mulf %20, %19 : vector<1x128xf32>
    %cst_12 = arith.constant 1.000000e+00 : f32
    %22 = vector.broadcast %cst_12 : f32 to vector<1x128xf32>
    %23 = arith.subf %21, %22 : vector<1x128xf32>
    %24 = vector.extract_strided_slice %16 {offsets = [0, 384], sizes = [1, 128], strides = [1, 1]} : vector<1x512xf32> to vector<1x128xf32>
    %25 = arith.mulf %18, %8 : vector<1x128xf32>
    %26 = arith.mulf %17, %23 : vector<1x128xf32>
    %27 = arith.addf %25, %26 : vector<1x128xf32>
    %28 = math.tanh %27 : vector<1x128xf32>
    %29 = arith.mulf %24, %28 : vector<1x128xf32>
    %30 = vector.extract_strided_slice %5 {offsets = [1, 0], sizes = [1, 512], strides = [1, 1]} : vector<8x512xf32> to vector<1x512xf32>
    %cst_13 = arith.constant dense<0.000000e+00> : vector<1x512xf32>
    %31 = tpu.matmul %29, %6, %cst_13 {dimension_numbers = #tpu.dot_dimension_numbers<[1], [0], [0], [1], [0, 0, 1, 1], [], []>} : vector<1x128xf32>, vector<128x512xf32>, vector<1x512xf32> -> vector<1x512xf32>
    %32 = arith.addf %30, %31 : vector<1x512xf32>
    %33 = arith.negf %32 : vector<1x512xf32>
    %34 = math.exp %33 : vector<1x512xf32>
    %cst_14 = arith.constant 1.000000e+00 : f32
    %35 = vector.broadcast %cst_14 : f32 to vector<1x512xf32>
    %36 = arith.addf %35, %34 : vector<1x512xf32>
    %37 = arith.divf %35, %36 : vector<1x512xf32>
    %38 = vector.extract_strided_slice %37 {offsets = [0, 0], sizes = [1, 128], strides = [1, 1]} : vector<1x512xf32> to vector<1x128xf32>
    %39 = vector.extract_strided_slice %37 {offsets = [0, 128], sizes = [1, 128], strides = [1, 1]} : vector<1x512xf32> to vector<1x128xf32>
    %40 = vector.extract_strided_slice %37 {offsets = [0, 256], sizes = [1, 128], strides = [1, 1]} : vector<1x512xf32> to vector<1x128xf32>
    %cst_15 = arith.constant 2.000000e+00 : f32
    %41 = vector.broadcast %cst_15 : f32 to vector<1x128xf32>
    %42 = arith.mulf %41, %40 : vector<1x128xf32>
    %cst_16 = arith.constant 1.000000e+00 : f32
    %43 = vector.broadcast %cst_16 : f32 to vector<1x128xf32>
    %44 = arith.subf %42, %43 : vector<1x128xf32>
    %45 = vector.extract_strided_slice %37 {offsets = [0, 384], sizes = [1, 128], strides = [1, 1]} : vector<1x512xf32> to vector<1x128xf32>
    %46 = arith.mulf %39, %27 : vector<1x128xf32>
    %47 = arith.mulf %38, %44 : vector<1x128xf32>
    %48 = arith.addf %46, %47 : vector<1x128xf32>
    %49 = math.tanh %48 : vector<1x128xf32>
    %50 = arith.mulf %45, %49 : vector<1x128xf32>
    %51 = vector.extract_strided_slice %5 {offsets = [2, 0], sizes = [1, 512], strides = [1, 1]} : vector<8x512xf32> to vector<1x512xf32>
    %cst_17 = arith.constant dense<0.000000e+00> : vector<1x512xf32>
    %52 = tpu.matmul %50, %6, %cst_17 {dimension_numbers = #tpu.dot_dimension_numbers<[1], [0], [0], [1], [0, 0, 1, 1], [], []>} : vector<1x128xf32>, vector<128x512xf32>, vector<1x512xf32> -> vector<1x512xf32>
    %53 = arith.addf %51, %52 : vector<1x512xf32>
    %54 = arith.negf %53 : vector<1x512xf32>
    %55 = math.exp %54 : vector<1x512xf32>
    %cst_18 = arith.constant 1.000000e+00 : f32
    %56 = vector.broadcast %cst_18 : f32 to vector<1x512xf32>
    %57 = arith.addf %56, %55 : vector<1x512xf32>
    %58 = arith.divf %56, %57 : vector<1x512xf32>
    %59 = vector.extract_strided_slice %58 {offsets = [0, 0], sizes = [1, 128], strides = [1, 1]} : vector<1x512xf32> to vector<1x128xf32>
    %60 = vector.extract_strided_slice %58 {offsets = [0, 128], sizes = [1, 128], strides = [1, 1]} : vector<1x512xf32> to vector<1x128xf32>
    %61 = vector.extract_strided_slice %58 {offsets = [0, 256], sizes = [1, 128], strides = [1, 1]} : vector<1x512xf32> to vector<1x128xf32>
    %cst_19 = arith.constant 2.000000e+00 : f32
    %62 = vector.broadcast %cst_19 : f32 to vector<1x128xf32>
    %63 = arith.mulf %62, %61 : vector<1x128xf32>
    %cst_20 = arith.constant 1.000000e+00 : f32
    %64 = vector.broadcast %cst_20 : f32 to vector<1x128xf32>
    %65 = arith.subf %63, %64 : vector<1x128xf32>
    %66 = vector.extract_strided_slice %58 {offsets = [0, 384], sizes = [1, 128], strides = [1, 1]} : vector<1x512xf32> to vector<1x128xf32>
    %67 = arith.mulf %60, %48 : vector<1x128xf32>
    %68 = arith.mulf %59, %65 : vector<1x128xf32>
    %69 = arith.addf %67, %68 : vector<1x128xf32>
    %70 = math.tanh %69 : vector<1x128xf32>
    %71 = arith.mulf %66, %70 : vector<1x128xf32>
    %72 = vector.extract_strided_slice %5 {offsets = [3, 0], sizes = [1, 512], strides = [1, 1]} : vector<8x512xf32> to vector<1x512xf32>
    %cst_21 = arith.constant dense<0.000000e+00> : vector<1x512xf32>
    %73 = tpu.matmul %71, %6, %cst_21 {dimension_numbers = #tpu.dot_dimension_numbers<[1], [0], [0], [1], [0, 0, 1, 1], [], []>} : vector<1x128xf32>, vector<128x512xf32>, vector<1x512xf32> -> vector<1x512xf32>
    %74 = arith.addf %72, %73 : vector<1x512xf32>
    %75 = arith.negf %74 : vector<1x512xf32>
    %76 = math.exp %75 : vector<1x512xf32>
    %cst_22 = arith.constant 1.000000e+00 : f32
    %77 = vector.broadcast %cst_22 : f32 to vector<1x512xf32>
    %78 = arith.addf %77, %76 : vector<1x512xf32>
    %79 = arith.divf %77, %78 : vector<1x512xf32>
    %80 = vector.extract_strided_slice %79 {offsets = [0, 0], sizes = [1, 128], strides = [1, 1]} : vector<1x512xf32> to vector<1x128xf32>
    %81 = vector.extract_strided_slice %79 {offsets = [0, 128], sizes = [1, 128], strides = [1, 1]} : vector<1x512xf32> to vector<1x128xf32>
    %82 = vector.extract_strided_slice %79 {offsets = [0, 256], sizes = [1, 128], strides = [1, 1]} : vector<1x512xf32> to vector<1x128xf32>
    %cst_23 = arith.constant 2.000000e+00 : f32
    %83 = vector.broadcast %cst_23 : f32 to vector<1x128xf32>
    %84 = arith.mulf %83, %82 : vector<1x128xf32>
    %cst_24 = arith.constant 1.000000e+00 : f32
    %85 = vector.broadcast %cst_24 : f32 to vector<1x128xf32>
    %86 = arith.subf %84, %85 : vector<1x128xf32>
    %87 = vector.extract_strided_slice %79 {offsets = [0, 384], sizes = [1, 128], strides = [1, 1]} : vector<1x512xf32> to vector<1x128xf32>
    %88 = arith.mulf %81, %69 : vector<1x128xf32>
    %89 = arith.mulf %80, %86 : vector<1x128xf32>
    %90 = arith.addf %88, %89 : vector<1x128xf32>
    %91 = math.tanh %90 : vector<1x128xf32>
    %92 = arith.mulf %87, %91 : vector<1x128xf32>
    %93 = vector.extract_strided_slice %5 {offsets = [4, 0], sizes = [1, 512], strides = [1, 1]} : vector<8x512xf32> to vector<1x512xf32>
    %cst_25 = arith.constant dense<0.000000e+00> : vector<1x512xf32>
    %94 = tpu.matmul %92, %6, %cst_25 {dimension_numbers = #tpu.dot_dimension_numbers<[1], [0], [0], [1], [0, 0, 1, 1], [], []>} : vector<1x128xf32>, vector<128x512xf32>, vector<1x512xf32> -> vector<1x512xf32>
    %95 = arith.addf %93, %94 : vector<1x512xf32>
    %96 = arith.negf %95 : vector<1x512xf32>
    %97 = math.exp %96 : vector<1x512xf32>
    %cst_26 = arith.constant 1.000000e+00 : f32
    %98 = vector.broadcast %cst_26 : f32 to vector<1x512xf32>
    %99 = arith.addf %98, %97 : vector<1x512xf32>
    %100 = arith.divf %98, %99 : vector<1x512xf32>
    %101 = vector.extract_strided_slice %100 {offsets = [0, 0], sizes = [1, 128], strides = [1, 1]} : vector<1x512xf32> to vector<1x128xf32>
    %102 = vector.extract_strided_slice %100 {offsets = [0, 128], sizes = [1, 128], strides = [1, 1]} : vector<1x512xf32> to vector<1x128xf32>
    %103 = vector.extract_strided_slice %100 {offsets = [0, 256], sizes = [1, 128], strides = [1, 1]} : vector<1x512xf32> to vector<1x128xf32>
    %cst_27 = arith.constant 2.000000e+00 : f32
    %104 = vector.broadcast %cst_27 : f32 to vector<1x128xf32>
    %105 = arith.mulf %104, %103 : vector<1x128xf32>
    %cst_28 = arith.constant 1.000000e+00 : f32
    %106 = vector.broadcast %cst_28 : f32 to vector<1x128xf32>
    %107 = arith.subf %105, %106 : vector<1x128xf32>
    %108 = vector.extract_strided_slice %100 {offsets = [0, 384], sizes = [1, 128], strides = [1, 1]} : vector<1x512xf32> to vector<1x128xf32>
    %109 = arith.mulf %102, %90 : vector<1x128xf32>
    %110 = arith.mulf %101, %107 : vector<1x128xf32>
    %111 = arith.addf %109, %110 : vector<1x128xf32>
    %112 = math.tanh %111 : vector<1x128xf32>
    %113 = arith.mulf %108, %112 : vector<1x128xf32>
    %114 = vector.extract_strided_slice %5 {offsets = [5, 0], sizes = [1, 512], strides = [1, 1]} : vector<8x512xf32> to vector<1x512xf32>
    %cst_29 = arith.constant dense<0.000000e+00> : vector<1x512xf32>
    %115 = tpu.matmul %113, %6, %cst_29 {dimension_numbers = #tpu.dot_dimension_numbers<[1], [0], [0], [1], [0, 0, 1, 1], [], []>} : vector<1x128xf32>, vector<128x512xf32>, vector<1x512xf32> -> vector<1x512xf32>
    %116 = arith.addf %114, %115 : vector<1x512xf32>
    %117 = arith.negf %116 : vector<1x512xf32>
    %118 = math.exp %117 : vector<1x512xf32>
    %cst_30 = arith.constant 1.000000e+00 : f32
    %119 = vector.broadcast %cst_30 : f32 to vector<1x512xf32>
    %120 = arith.addf %119, %118 : vector<1x512xf32>
    %121 = arith.divf %119, %120 : vector<1x512xf32>
    %122 = vector.extract_strided_slice %121 {offsets = [0, 0], sizes = [1, 128], strides = [1, 1]} : vector<1x512xf32> to vector<1x128xf32>
    %123 = vector.extract_strided_slice %121 {offsets = [0, 128], sizes = [1, 128], strides = [1, 1]} : vector<1x512xf32> to vector<1x128xf32>
    %124 = vector.extract_strided_slice %121 {offsets = [0, 256], sizes = [1, 128], strides = [1, 1]} : vector<1x512xf32> to vector<1x128xf32>
    %cst_31 = arith.constant 2.000000e+00 : f32
    %125 = vector.broadcast %cst_31 : f32 to vector<1x128xf32>
    %126 = arith.mulf %125, %124 : vector<1x128xf32>
    %cst_32 = arith.constant 1.000000e+00 : f32
    %127 = vector.broadcast %cst_32 : f32 to vector<1x128xf32>
    %128 = arith.subf %126, %127 : vector<1x128xf32>
    %129 = vector.extract_strided_slice %121 {offsets = [0, 384], sizes = [1, 128], strides = [1, 1]} : vector<1x512xf32> to vector<1x128xf32>
    %130 = arith.mulf %123, %111 : vector<1x128xf32>
    %131 = arith.mulf %122, %128 : vector<1x128xf32>
    %132 = arith.addf %130, %131 : vector<1x128xf32>
    %133 = math.tanh %132 : vector<1x128xf32>
    %134 = arith.mulf %129, %133 : vector<1x128xf32>
    %135 = vector.extract_strided_slice %5 {offsets = [6, 0], sizes = [1, 512], strides = [1, 1]} : vector<8x512xf32> to vector<1x512xf32>
    %cst_33 = arith.constant dense<0.000000e+00> : vector<1x512xf32>
    %136 = tpu.matmul %134, %6, %cst_33 {dimension_numbers = #tpu.dot_dimension_numbers<[1], [0], [0], [1], [0, 0, 1, 1], [], []>} : vector<1x128xf32>, vector<128x512xf32>, vector<1x512xf32> -> vector<1x512xf32>
    %137 = arith.addf %135, %136 : vector<1x512xf32>
    %138 = arith.negf %137 : vector<1x512xf32>
    %139 = math.exp %138 : vector<1x512xf32>
    %cst_34 = arith.constant 1.000000e+00 : f32
    %140 = vector.broadcast %cst_34 : f32 to vector<1x512xf32>
    %141 = arith.addf %140, %139 : vector<1x512xf32>
    %142 = arith.divf %140, %141 : vector<1x512xf32>
    %143 = vector.extract_strided_slice %142 {offsets = [0, 0], sizes = [1, 128], strides = [1, 1]} : vector<1x512xf32> to vector<1x128xf32>
    %144 = vector.extract_strided_slice %142 {offsets = [0, 128], sizes = [1, 128], strides = [1, 1]} : vector<1x512xf32> to vector<1x128xf32>
    %145 = vector.extract_strided_slice %142 {offsets = [0, 256], sizes = [1, 128], strides = [1, 1]} : vector<1x512xf32> to vector<1x128xf32>
    %cst_35 = arith.constant 2.000000e+00 : f32
    %146 = vector.broadcast %cst_35 : f32 to vector<1x128xf32>
    %147 = arith.mulf %146, %145 : vector<1x128xf32>
    %cst_36 = arith.constant 1.000000e+00 : f32
    %148 = vector.broadcast %cst_36 : f32 to vector<1x128xf32>
    %149 = arith.subf %147, %148 : vector<1x128xf32>
    %150 = vector.extract_strided_slice %142 {offsets = [0, 384], sizes = [1, 128], strides = [1, 1]} : vector<1x512xf32> to vector<1x128xf32>
    %151 = arith.mulf %144, %132 : vector<1x128xf32>
    %152 = arith.mulf %143, %149 : vector<1x128xf32>
    %153 = arith.addf %151, %152 : vector<1x128xf32>
    %154 = math.tanh %153 : vector<1x128xf32>
    %155 = arith.mulf %150, %154 : vector<1x128xf32>
    %156 = vector.extract_strided_slice %5 {offsets = [7, 0], sizes = [1, 512], strides = [1, 1]} : vector<8x512xf32> to vector<1x512xf32>
    %cst_37 = arith.constant dense<0.000000e+00> : vector<1x512xf32>
    %157 = tpu.matmul %155, %6, %cst_37 {dimension_numbers = #tpu.dot_dimension_numbers<[1], [0], [0], [1], [0, 0, 1, 1], [], []>} : vector<1x128xf32>, vector<128x512xf32>, vector<1x512xf32> -> vector<1x512xf32>
    %158 = arith.addf %156, %157 : vector<1x512xf32>
    %159 = arith.negf %158 : vector<1x512xf32>
    %160 = math.exp %159 : vector<1x512xf32>
    %cst_38 = arith.constant 1.000000e+00 : f32
    %161 = vector.broadcast %cst_38 : f32 to vector<1x512xf32>
    %162 = arith.addf %161, %160 : vector<1x512xf32>
    %163 = arith.divf %161, %162 : vector<1x512xf32>
    %164 = vector.extract_strided_slice %163 {offsets = [0, 0], sizes = [1, 128], strides = [1, 1]} : vector<1x512xf32> to vector<1x128xf32>
    %165 = vector.extract_strided_slice %163 {offsets = [0, 128], sizes = [1, 128], strides = [1, 1]} : vector<1x512xf32> to vector<1x128xf32>
    %166 = vector.extract_strided_slice %163 {offsets = [0, 256], sizes = [1, 128], strides = [1, 1]} : vector<1x512xf32> to vector<1x128xf32>
    %cst_39 = arith.constant 2.000000e+00 : f32
    %167 = vector.broadcast %cst_39 : f32 to vector<1x128xf32>
    %168 = arith.mulf %167, %166 : vector<1x128xf32>
    %cst_40 = arith.constant 1.000000e+00 : f32
    %169 = vector.broadcast %cst_40 : f32 to vector<1x128xf32>
    %170 = arith.subf %168, %169 : vector<1x128xf32>
    %171 = vector.extract_strided_slice %163 {offsets = [0, 384], sizes = [1, 128], strides = [1, 1]} : vector<1x512xf32> to vector<1x128xf32>
    %172 = arith.mulf %165, %153 : vector<1x128xf32>
    %173 = arith.mulf %164, %170 : vector<1x128xf32>
    %174 = arith.addf %172, %173 : vector<1x128xf32>
    %175 = math.tanh %174 : vector<1x128xf32>
    %176 = arith.mulf %171, %175 : vector<1x128xf32>
    %c0_41 = arith.constant 0 : index
    %c0_42 = arith.constant 0 : index
    %177 = vector.load %arg4[%c0_41, %c0_42] : memref<128x5xf32, #tpu.memory_space<vmem>>, vector<128x5xf32>
    %cst_43 = arith.constant dense<0.000000e+00> : vector<1x5xf32>
    %178 = tpu.matmul %176, %177, %cst_43 {dimension_numbers = #tpu.dot_dimension_numbers<[1], [0], [0], [1], [0, 0, 1, 1], [], []>} : vector<1x128xf32>, vector<128x5xf32>, vector<1x5xf32> -> vector<1x5xf32>
    %c0_44 = arith.constant 0 : index
    %c0_45 = arith.constant 0 : index
    %179 = vector.load %arg5[%c0_44, %c0_45] : memref<1x5xf32, #tpu.memory_space<vmem>>, vector<1x5xf32>
    %180 = arith.addf %178, %179 : vector<1x5xf32>
    %cst_46 = arith.constant 0.000000e+00 : f32
    %181 = vector.broadcast %cst_46 : f32 to vector<1x5xf32>
    %182 = arith.maximumf %180, %181 : vector<1x5xf32>
    %c0_47 = arith.constant 0 : index
    %c0_48 = arith.constant 0 : index
    %183 = vector.load %arg6[%c0_47, %c0_48] : memref<5x3xf32, #tpu.memory_space<vmem>>, vector<5x3xf32>
    %cst_49 = arith.constant dense<0.000000e+00> : vector<1x3xf32>
    %184 = tpu.matmul %182, %183, %cst_49 {dimension_numbers = #tpu.dot_dimension_numbers<[1], [0], [0], [1], [0, 0, 1, 1], [], []>} : vector<1x5xf32>, vector<5x3xf32>, vector<1x3xf32> -> vector<1x3xf32>
    %c0_50 = arith.constant 0 : index
    %c0_51 = arith.constant 0 : index
    %185 = vector.load %arg7[%c0_50, %c0_51] : memref<1x3xf32, #tpu.memory_space<vmem>>, vector<1x3xf32>
    %186 = arith.addf %184, %185 : vector<1x3xf32>
    %cst_52 = arith.constant 0.000000e+00 : f32
    %187 = vector.broadcast %cst_52 : f32 to vector<1x3xf32>
    %188 = arith.maximumf %186, %187 : vector<1x3xf32>
    %c0_53 = arith.constant 0 : index
    %c0_54 = arith.constant 0 : index
    %189 = vector.load %arg8[%c0_53, %c0_54] : memref<1x3xf32, #tpu.memory_space<vmem>>, vector<1x3xf32>
    %190 = arith.mulf %188, %189 : vector<1x3xf32>
    %cst_55 = arith.constant dense<0.000000e+00> : vector<1xf32>
    %191 = vector.multi_reduction <add>, %190, %cst_55 [1] : vector<1x3xf32> to vector<1xf32>
    %192 = vector.shape_cast %191 : vector<1xf32> to vector<1x1xf32>
    %c0_56 = arith.constant 0 : index
    %c0_57 = arith.constant 0 : index
    %193 = vector.load %arg9[%c0_56, %c0_57] : memref<1x1xf32, #tpu.memory_space<vmem>>, vector<1x1xf32>
    %194 = arith.addf %192, %193 : vector<1x1xf32>
    %cst_58 = arith.constant 0.000000e+00 : f32
    %195 = vector.broadcast %cst_58 : f32 to vector<1x1xf32>
    %196 = arith.maximumf %194, %195 : vector<1x1xf32>
    %c0_59 = arith.constant 0 : index
    %c0_60 = arith.constant 0 : index
    %197 = vector.load %arg10[%c0_59, %c0_60] : memref<1x1xf32, #tpu.memory_space<vmem>>, vector<1x1xf32>
    tpu.vector_store %arg10[%c0_59, %c0_60], %196 {strides = array<i32>} : memref<1x1xf32, #tpu.memory_space<vmem>>, vector<1x1xf32>,
    return
  }
}

</mosaic_0001>

<llo_original>
// kernel: tpu_custom_call.1
$region0: #{tpu_custom_call.1}
  #allocation0 [shape = 'u32[]', space=smem, size = 0x4, offset = 0x4, fixed_abs, tag = 'smem constant byte address 0x4 - core index']
  #allocation1 [shape = 'u32[144,128]{1,0:T(1,128)}', space=vmem, size = 0x12000, scoped, tag = 'internal scratch']
  #allocation2 [shape = 'f32[1,1]{1,0:T(1,128)S(1)}', space=vmem, size = 0x200, scoped, tag = 'scoped memory for tpu_custom_call.1']
  %s0 = inlined_call_operand.vmem [shape: f32[8,6], index: 0, kind: input, shape index: {}]
  %s1 = inlined_call_operand.vmem [shape: f32[6,512], index: 1, kind: input, shape index: {}]
  %s2 = inlined_call_operand.hbm [shape: f32[128,512], index: 2, kind: input, shape index: {}]
  %s3 = inlined_call_operand.vmem [shape: f32[1,512], index: 3, kind: input, shape index: {}]
  %s4 = inlined_call_operand.vmem [shape: f32[128,5], index: 4, kind: input, shape index: {}]
  %s5 = inlined_call_operand.vmem [shape: f32[1,5], index: 5, kind: input, shape index: {}]
  %s6 = inlined_call_operand.vmem [shape: f32[5,3], index: 6, kind: input, shape index: {}]
  %s7 = inlined_call_operand.vmem [shape: f32[1,3], index: 7, kind: input, shape index: {}]
  %s8 = inlined_call_operand.vmem [shape: f32[1,3], index: 8, kind: input, shape index: {}]
  %s9 = inlined_call_operand.<no memory space> [shape: f32[1,1], index: 9, kind: input, shape index: {}]
  %s10 = inlined_call_operand.hbm [shape: f32[1,1], index: 10, kind: output, shape index: {}]
  %s11 = sld [smem:[#allocation0]]
  $region54: #{tpu_custom_call.1} parent=0
    _
  %s13 = ssub.s32 1, %s11
  %s14 = scalar_select 0, %s13, %s11
  %v15 = vstv %s9
  %16 = vst [vmem:[#allocation2] sm:$0x1] %v15
  $region1: #{tpu_custom_call.1} parent=0
    #allocation3 [shape = 'u8[262144]{0}', space=vmem, size = 0x40000, scoped, tag = 'input window, operand 2, single buffered']
    #allocation4 [shape = 's32[1]{0}', space=sflag, size = 0x4, scoped, tag = 'scoped memory for tpu_custom_call.1']
    #allocation5 [shape = 's32[1]{0}', space=sflag, size = 0x4, scoped, tag = 'scoped memory for tpu_custom_call.1']
    #allocation6 [shape = 'u8[512]{0}', space=vmem, size = 0x400, scoped, tag = 'output window, operand 0, single buffered']
    %17 = vsyncpa [#allocation4], 0
    %18 = vsyncpa [#allocation5], 0
    // Predicated region
    $region2: #{tpu_custom_call.1} parent=1 // pred_check
      _
    $region3: #{tpu_custom_call.1} parent=1 // pred_check_branch
      %20 = sbr.rel (0) target = $region5
    $region4: #{tpu_custom_call.1} parent=1 // pred_region
      _
    $region5: #{tpu_custom_call.1} parent=1 // pred_fallthru
      _
    // Predicated region
    $region6: #{tpu_custom_call.1} parent=1 // pred_check
      _
    $region7: #{tpu_custom_call.1} parent=1 // pred_check_branch
      %22 = sbr.rel (0) target = $region9
    $region8: #{tpu_custom_call.1} parent=1 // pred_region
      _
    $region9: #{tpu_custom_call.1} parent=1 // pred_fallthru
      _
    // Predicated region
    $region10: #{tpu_custom_call.1} parent=1 // pred_check
      _
    $region11: #{tpu_custom_call.1} parent=1 // pred_check_branch
      %24 = sbr.rel (0) target = $region13
    $region12: #{tpu_custom_call.1} parent=1 // pred_region
      %s26 = ssub.s32 8192, 8192
      %27 = vsyncadd [#allocation4], %s26
      %s28 = sshll.u32 [#allocation3], 4
      %s29 = int_to_ptr.vmem [resolvable:$true] %s28
      %34 = dma.hbm_to_vmem [thread:$0]  %s2, 8192, %s29, [#allocation4], 512, 512, 32
    $region13: #{tpu_custom_call.1} parent=1 // pred_fallthru
      _
    // Predicated region
    $region14: #{tpu_custom_call.1} parent=1 // pred_check
      _
    $region15: #{tpu_custom_call.1} parent=1 // pred_check_branch
      %36 = sbr.rel (0) target = $region17
    $region16: #{tpu_custom_call.1} parent=1 // pred_region
      _
    $region17: #{tpu_custom_call.1} parent=1 // pred_fallthru
      _
    // Predicated region
    $region18: #{tpu_custom_call.1} parent=1 // pred_check
      _
    $region19: #{tpu_custom_call.1} parent=1 // pred_check_branch
      %38 = sbr.rel (0) target = $region21
    $region20: #{tpu_custom_call.1} parent=1 // pred_region
      _
    $region21: #{tpu_custom_call.1} parent=1 // pred_fallthru
      _
    // Predicated region
    $region22: #{tpu_custom_call.1} parent=1 // pred_check
      _
    $region23: #{tpu_custom_call.1} parent=1 // pred_check_branch
      %40 = sbr.rel (0) target = $region25
    $region24: #{tpu_custom_call.1} parent=1 // pred_region
      _
    $region25: #{tpu_custom_call.1} parent=1 // pred_fallthru
      _
    // Predicated region
    $region26: #{tpu_custom_call.1} parent=1 // pred_check
      _
    $region27: #{tpu_custom_call.1} parent=1 // pred_check_branch
      %42 = sbr.rel (0) target = $region29
    $region28: #{tpu_custom_call.1} parent=1 // pred_region
      _
    $region29: #{tpu_custom_call.1} parent=1 // pred_fallthru
      _
    // Predicated region
    $region30: #{tpu_custom_call.1} parent=1 // pred_check
      _
    $region31: #{tpu_custom_call.1} parent=1 // pred_check_branch
      %44 = sbr.rel (0) target = $region33
    $region32: #{tpu_custom_call.1} parent=1 // pred_region
      _
    $region33: #{tpu_custom_call.1} parent=1 // pred_fallthru
      _
    // Predicated region
    $region34: #{tpu_custom_call.1} parent=1 // pred_check
      _
    $region35: #{tpu_custom_call.1} parent=1 // pred_check_branch
      %46 = sbr.rel (0) target = $region37
    $region36: #{tpu_custom_call.1} parent=1 // pred_region
      _
    $region37: #{tpu_custom_call.1} parent=1 // pred_fallthru
      _
    // Predicated region
    $region38: #{tpu_custom_call.1} parent=1 // pred_check
      _
    $region39: #{tpu_custom_call.1} parent=1 // pred_check_branch
      %48 = sbr.rel (0) target = $region41
    $region40: #{tpu_custom_call.1} parent=1 // pred_region
      _
    $region41: #{tpu_custom_call.1} parent=1 // pred_fallthru
      _
    // Predicated region
    $region42: #{tpu_custom_call.1} parent=1 // pred_check
      _
    $region43: #{tpu_custom_call.1} parent=1 // pred_check_branch
      %50 = sbr.rel (0) target = $region45
    $region44: #{tpu_custom_call.1} parent=1 // pred_region
      %51 = dma.done [#allocation4], 8192
    $region45: #{tpu_custom_call.1} parent=1 // pred_fallthru
      _
    %v52 = vld [vmem:[%s0] sm:$0xff]
    %v53 = vld [vmem:[%s1] sm:$0x3f]
    %v54 = vld [vmem:[%s1 + $0x8] sm:$0x3f]
    %v55 = vld [vmem:[%s1 + $0x10] sm:$0x3f]
    %v56 = vld [vmem:[%s1 + $0x18] sm:$0x3f]
    %v57 = vld [vmem:[%s3] sm:$0xf]
    %v59 = vlaneseq
    %v60 = vshrl.u32 %v59, 7
    %v61 = vsub.s32 0, %v60
    %v62 = vrot.slane %v57, %v61
    %v63 = vlaneseq
    %v64 = vshrl.u32 %v63, 7
    %v65 = vsub.s32 1, %v64
    %v66 = vrot.slane %v57, %v65
    %v67 = vlaneseq
    %v68 = vshrl.u32 %v67, 7
    %v69 = vsub.s32 2, %v68
    %v70 = vrot.slane %v57, %v69
    %v71 = vlaneseq
    %v72 = vshrl.u32 %v71, 7
    %v73 = vsub.s32 3, %v72
    %v74 = vrot.slane %v57, %v73
    %vm79 = vcmask 48128
    %v81 = vsel %vm79, %v52, 0
    %vm83 = vcmask 1045504
    %v85 = vsel %vm83, %v53, 0
    %v88 = vsel %vm83, %v54, 0
    %v91 = vsel %vm83, %v55, 0
    %v94 = vsel %vm83, %v56, 0
    %96 = vmatprep.subr.mxu0 %v88
    %97 = vmatpush1.msra.mxu0 %v85
    %98 = vmatprep.subr.mxu0 0.0
    %99 = vmatpush1.msra.mxu0 0.0
    %100 = vmatprep.subr.mxu0 0.0
    %101 = vmatpush1.msra.mxu0 0.0
    %102 = vmatprep.subr.mxu0 0.0
    %103 = vmatpush1.msra.mxu0 0.0
    %104 = vmatprep.subr.mxu0 0.0
    %105 = vmatpush1.msra.mxu0 0.0
    %106 = vmatprep.subr.mxu0 0.0
    %107 = vmatpush1.msra.mxu0 0.0
    %108 = vmatprep.subr.mxu0 0.0
    %109 = vmatpush1.msra.mxu0 0.0
    %110 = vmatprep.subr.mxu0 0.0
    %111 = vmatpush1.msra.mxu0 0.0
    %112 = vmatprep.subr.mxu0 0.0
    %113 = vmatpush1.msra.mxu0 0.0
    %114 = vmatprep.subr.mxu0 0.0
    %115 = vmatpush1.msra.mxu0 0.0
    %116 = vmatprep.subr.mxu0 0.0
    %117 = vmatpush1.msra.mxu0 0.0
    %118 = vmatprep.subr.mxu0 0.0
    %119 = vmatpush1.msra.mxu0 0.0
    %120 = vmatprep.subr.mxu0 0.0
    %121 = vmatpush1.msra.mxu0 0.0
    %122 = vmatprep.subr.mxu0 0.0
    %123 = vmatpush1.msra.mxu0 0.0
    %124 = vmatprep.subr.mxu0 0.0
    %125 = vmatpush1.msra.mxu0 0.0
    %126 = vmatprep.subr.mxu0 0.0
    %127 = vmatpush1.msra.mxu0 0.0
    %128 = vmatprep.subr.mxu0 0.0
    %129 = vmatpush1.msra.mxu0 0.0
    %130 = vmatprep.subr.mxu0 0.0
    %131 = vmatpush1.msra.mxu0 0.0
    %132 = vmatprep.subr.mxu0 0.0
    %133 = vmatpush1.msra.mxu0 0.0
    %134 = vmatprep.subr.mxu0 0.0
    %135 = vmatpush1.msra.mxu0 0.0
    %136 = vmatprep.subr.mxu0 0.0
    %137 = vmatpush1.msra.mxu0 0.0
    %138 = vmatprep.subr.mxu0 0.0
    %139 = vmatpush1.msra.mxu0 0.0
    %140 = vmatprep.subr.mxu0 0.0
    %141 = vmatpush1.msra.mxu0 0.0
    %142 = vmatprep.subr.mxu0 0.0
    %143 = vmatpush1.msra.mxu0 0.0
    %144 = vmatprep.subr.mxu0 0.0
    %145 = vmatpush1.msra.mxu0 0.0
    %146 = vmatprep.subr.mxu0 0.0
    %147 = vmatpush1.msra.mxu0 0.0
    %148 = vmatprep.subr.mxu0 0.0
    %149 = vmatpush1.msra.mxu0 0.0
    %150 = vmatprep.subr.mxu0 0.0
    %151 = vmatpush1.msra.mxu0 0.0
    %152 = vmatprep.subr.mxu0 0.0
    %153 = vmatpush1.msra.mxu0 0.0
    %154 = vmatprep.subr.mxu0 0.0
    %155 = vmatpush1.msra.mxu0 0.0
    %156 = vmatprep.subr.mxu0 0.0
    %157 = vmatpush1.msra.mxu0 0.0
    %158 = vmatprep.subr.mxu0 0.0
    %159 = vmatpush1.msra.mxu0 0.0
    %160 = vmatprep.mubr.f32.mxu0 0.0
    %161 = vmatmul.mubr.f32.gmra.mrb[0].mxu0 %v81
    %v162 = vpop.f32.mrb[0].mxu0
    %v163 = vadd.f32 %v62, %v162
    %v164 = vpop.f32.mrb[0].mxu0
    %v165 = vadd.f32 %v66, %v164
    %166 = vdwg.mxu0
    %167 = vmatprep.subr.mxu0 %v94
    %168 = vmatpush1.msra.mxu0 %v91
    %169 = vmatprep.subr.mxu0 0.0
    %170 = vmatpush1.msra.mxu0 0.0
    %171 = vmatprep.subr.mxu0 0.0
    %172 = vmatpush1.msra.mxu0 0.0
    %173 = vmatprep.subr.mxu0 0.0
    %174 = vmatpush1.msra.mxu0 0.0
    %175 = vmatprep.subr.mxu0 0.0
    %176 = vmatpush1.msra.mxu0 0.0
    %177 = vmatprep.subr.mxu0 0.0
    %178 = vmatpush1.msra.mxu0 0.0
    %179 = vmatprep.subr.mxu0 0.0
    %180 = vmatpush1.msra.mxu0 0.0
    %181 = vmatprep.subr.mxu0 0.0
    %182 = vmatpush1.msra.mxu0 0.0
    %183 = vmatprep.subr.mxu0 0.0
    %184 = vmatpush1.msra.mxu0 0.0
    %185 = vmatprep.subr.mxu0 0.0
    %186 = vmatpush1.msra.mxu0 0.0
    %187 = vmatprep.subr.mxu0 0.0
    %188 = vmatpush1.msra.mxu0 0.0
    %189 = vmatprep.subr.mxu0 0.0
    %190 = vmatpush1.msra.mxu0 0.0
    %191 = vmatprep.subr.mxu0 0.0
    %192 = vmatpush1.msra.mxu0 0.0
    %193 = vmatprep.subr.mxu0 0.0
    %194 = vmatpush1.msra.mxu0 0.0
    %195 = vmatprep.subr.mxu0 0.0
    %196 = vmatpush1.msra.mxu0 0.0
    %197 = vmatprep.subr.mxu0 0.0
    %198 = vmatpush1.msra.mxu0 0.0
    %199 = vmatprep.subr.mxu0 0.0
    %200 = vmatpush1.msra.mxu0 0.0
    %201 = vmatprep.subr.mxu0 0.0
    %202 = vmatpush1.msra.mxu0 0.0
    %203 = vmatprep.subr.mxu0 0.0
    %204 = vmatpush1.msra.mxu0 0.0
    %205 = vmatprep.subr.mxu0 0.0
    %206 = vmatpush1.msra.mxu0 0.0
    %207 = vmatprep.subr.mxu0 0.0
    %208 = vmatpush1.msra.mxu0 0.0
    %209 = vmatprep.subr.mxu0 0.0
    %210 = vmatpush1.msra.mxu0 0.0
    %211 = vmatprep.subr.mxu0 0.0
    %212 = vmatpush1.msra.mxu0 0.0
    %213 = vmatprep.subr.mxu0 0.0
    %214 = vmatpush1.msra.mxu0 0.0
    %215 = vmatprep.subr.mxu0 0.0
    %216 = vmatpush1.msra.mxu0 0.0
    %217 = vmatprep.subr.mxu0 0.0
    %218 = vmatpush1.msra.mxu0 0.0
    %219 = vmatprep.subr.mxu0 0.0
    %220 = vmatpush1.msra.mxu0 0.0
    %221 = vmatprep.subr.mxu0 0.0
    %222 = vmatpush1.msra.mxu0 0.0
    %223 = vmatprep.subr.mxu0 0.0
    %224 = vmatpush1.msra.mxu0 0.0
    %225 = vmatprep.subr.mxu0 0.0
    %226 = vmatpush1.msra.mxu0 0.0
    %227 = vmatprep.subr.mxu0 0.0
    %228 = vmatpush1.msra.mxu0 0.0
    %229 = vmatprep.subr.mxu0 0.0
    %230 = vmatpush1.msra.mxu0 0.0
    %231 = vmatprep.mubr.f32.mxu0 0.0
    %232 = vmatmul.mubr.f32.gmra.mrb[0].mxu0 %v81
    %v233 = vpop.f32.mrb[0].mxu0
    %v234 = vadd.f32 %v70, %v233
    %v235 = vpop.f32.mrb[0].mxu0
    %v236 = vadd.f32 %v74, %v235
    %237 = vdwg.mxu0
    %v238 = vld [vmem:[#allocation3] sm:$0xff]
    %v239 = vld [vmem:[#allocation3 + $0x8] sm:$0xff]
    %v240 = vld [vmem:[#allocation3 + $0x10] sm:$0xff]
    %v241 = vld [vmem:[#allocation3 + $0x18] sm:$0xff]
    %v242 = vld [vmem:[#allocation3 + $0x20] sm:$0xff]
    %v243 = vld [vmem:[#allocation3 + $0x28] sm:$0xff]
    %v244 = vld [vmem:[#allocation3 + $0x30] sm:$0xff]
    %v245 = vld [vmem:[#allocation3 + $0x38] sm:$0xff]
    %v246 = vld [vmem:[#allocation3 + $0x40] sm:$0xff]
    %v247 = vld [vmem:[#allocation3 + $0x48] sm:$0xff]
    %v248 = vld [vmem:[#allocation3 + $0x50] sm:$0xff]
    %v249 = vld [vmem:[#allocation3 + $0x58] sm:$0xff]
    %v250 = vld [vmem:[#allocation3 + $0x60] sm:$0xff]
    %v251 = vld [vmem:[#allocation3 + $0x68] sm:$0xff]
    %v252 = vld [vmem:[#allocation3 + $0x70] sm:$0xff]
    %v253 = vld [vmem:[#allocation3 + $0x78] sm:$0xff]
    %v254 = vld [vmem:[#allocation3 + $0x80] sm:$0xff]
    %v255 = vld [vmem:[#allocation3 + $0x88] sm:$0xff]
    %v256 = vld [vmem:[#allocation3 + $0x90] sm:$0xff]
    %v257 = vld [vmem:[#allocation3 + $0x98] sm:$0xff]
    %v258 = vld [vmem:[#allocation3 + $0xa0] sm:$0xff]
    %v259 = vld [vmem:[#allocation3 + $0xa8] sm:$0xff]
    %v260 = vld [vmem:[#allocation3 + $0xb0] sm:$0xff]
    %v261 = vld [vmem:[#allocation3 + $0xb8] sm:$0xff]
    %v262 = vld [vmem:[#allocation3 + $0xc0] sm:$0xff]
    %v263 = vld [vmem:[#allocation3 + $0xc8] sm:$0xff]
    %v264 = vld [vmem:[#allocation3 + $0xd0] sm:$0xff]
    %v265 = vld [vmem:[#allocation3 + $0xd8] sm:$0xff]
    %v266 = vld [vmem:[#allocation3 + $0xe0] sm:$0xff]
    %v267 = vld [vmem:[#allocation3 + $0xe8] sm:$0xff]
    %v268 = vld [vmem:[#allocation3 + $0xf0] sm:$0xff]
    %v269 = vld [vmem:[#allocation3 + $0xf8] sm:$0xff]
    %v270 = vld [vmem:[#allocation3 + $0x100] sm:$0xff]
    %v271 = vld [vmem:[#allocation3 + $0x108] sm:$0xff]
    %v272 = vld [vmem:[#allocation3 + $0x110] sm:$0xff]
    %v273 = vld [vmem:[#allocation3 + $0x118] sm:$0xff]
    %v274 = vld [vmem:[#allocation3 + $0x120] sm:$0xff]
    %v275 = vld [vmem:[#allocation3 + $0x128] sm:$0xff]
    %v276 = vld [vmem:[#allocation3 + $0x130] sm:$0xff]
    %v277 = vld [vmem:[#allocation3 + $0x138] sm:$0xff]
    %v278 = vld [vmem:[#allocation3 + $0x140] sm:$0xff]
    %v279 = vld [vmem:[#allocation3 + $0x148] sm:$0xff]
    %v280 = vld [vmem:[#allocation3 + $0x150] sm:$0xff]
    %v281 = vld [vmem:[#allocation3 + $0x158] sm:$0xff]
    %v282 = vld [vmem:[#allocation3 + $0x160] sm:$0xff]
    %v283 = vld [vmem:[#allocation3 + $0x168] sm:$0xff]
    %v284 = vld [vmem:[#allocation3 + $0x170] sm:$0xff]
    %v285 = vld [vmem:[#allocation3 + $0x178] sm:$0xff]
    %v286 = vld [vmem:[#allocation3 + $0x180] sm:$0xff]
    %v287 = vld [vmem:[#allocation3 + $0x188] sm:$0xff]
    %v288 = vld [vmem:[#allocation3 + $0x190] sm:$0xff]
    %v289 = vld [vmem:[#allocation3 + $0x198] sm:$0xff]
    %v290 = vld [vmem:[#allocation3 + $0x1a0] sm:$0xff]
    %v291 = vld [vmem:[#allocation3 + $0x1a8] sm:$0xff]
    %v292 = vld [vmem:[#allocation3 + $0x1b0] sm:$0xff]
    %v293 = vld [vmem:[#allocation3 + $0x1b8] sm:$0xff]
    %v294 = vld [vmem:[#allocation3 + $0x1c0] sm:$0xff]
    %v295 = vld [vmem:[#allocation3 + $0x1c8] sm:$0xff]
    %v296 = vld [vmem:[#allocation3 + $0x1d0] sm:$0xff]
    %v297 = vld [vmem:[#allocation3 + $0x1d8] sm:$0xff]
    %v298 = vld [vmem:[#allocation3 + $0x1e0] sm:$0xff]
    %v299 = vld [vmem:[#allocation3 + $0x1e8] sm:$0xff]
    %v300 = vld [vmem:[#allocation3 + $0x1f0] sm:$0xff]
    %v301 = vld [vmem:[#allocation3 + $0x1f8] sm:$0xff]
    %302 = vmatprep.subr.mxu0 %v239
    %303 = vmatpush1.msra.mxu0 %v238
    %304 = vmatprep.subr.mxu0 %v243
    %305 = vmatpush1.msra.mxu0 %v242
    %306 = vmatprep.subr.mxu0 %v247
    %307 = vmatpush1.msra.mxu0 %v246
    %308 = vmatprep.subr.mxu0 %v251
    %309 = vmatpush1.msra.mxu0 %v250
    %310 = vmatprep.subr.mxu0 %v255
    %311 = vmatpush1.msra.mxu0 %v254
    %312 = vmatprep.subr.mxu0 %v259
    %313 = vmatpush1.msra.mxu0 %v258
    %314 = vmatprep.subr.mxu0 %v263
    %315 = vmatpush1.msra.mxu0 %v262
    %316 = vmatprep.subr.mxu0 %v267
    %317 = vmatpush1.msra.mxu0 %v266
    %318 = vmatprep.subr.mxu0 %v271
    %319 = vmatpush1.msra.mxu0 %v270
    %320 = vmatprep.subr.mxu0 %v275
    %321 = vmatpush1.msra.mxu0 %v274
    %322 = vmatprep.subr.mxu0 %v279
    %323 = vmatpush1.msra.mxu0 %v278
    %324 = vmatprep.subr.mxu0 %v283
    %325 = vmatpush1.msra.mxu0 %v282
    %326 = vmatprep.subr.mxu0 %v287
    %327 = vmatpush1.msra.mxu0 %v286
    %328 = vmatprep.subr.mxu0 %v291
    %329 = vmatpush1.msra.mxu0 %v290
    %330 = vmatprep.subr.mxu0 %v295
    %331 = vmatpush1.msra.mxu0 %v294
    %332 = vmatprep.subr.mxu0 %v299
    %333 = vmatpush1.msra.mxu0 %v298
    %334 = vmatprep.subr.mxu0 0.0
    %335 = vmatpush1.msra.mxu0 0.0
    %336 = vmatprep.subr.mxu0 0.0
    %337 = vmatpush1.msra.mxu0 0.0
    %338 = vmatprep.subr.mxu0 0.0
    %339 = vmatpush1.msra.mxu0 0.0
    %340 = vmatprep.subr.mxu0 0.0
    %341 = vmatpush1.msra.mxu0 0.0
    %342 = vmatprep.subr.mxu0 0.0
    %343 = vmatpush1.msra.mxu0 0.0
    %344 = vmatprep.subr.mxu0 0.0
    %345 = vmatpush1.msra.mxu0 0.0
    %346 = vmatprep.subr.mxu0 0.0
    %347 = vmatpush1.msra.mxu0 0.0
    %348 = vmatprep.subr.mxu0 0.0
    %349 = vmatpush1.msra.mxu0 0.0
    %350 = vmatprep.subr.mxu0 0.0
    %351 = vmatpush1.msra.mxu0 0.0
    %352 = vmatprep.subr.mxu0 0.0
    %353 = vmatpush1.msra.mxu0 0.0
    %354 = vmatprep.subr.mxu0 0.0
    %355 = vmatpush1.msra.mxu0 0.0
    %356 = vmatprep.subr.mxu0 0.0
    %357 = vmatpush1.msra.mxu0 0.0
    %358 = vmatprep.subr.mxu0 0.0
    %359 = vmatpush1.msra.mxu0 0.0
    %360 = vmatprep.subr.mxu0 0.0
    %361 = vmatpush1.msra.mxu0 0.0
    %362 = vmatprep.subr.mxu0 0.0
    %363 = vmatpush1.msra.mxu0 0.0
    %364 = vmatprep.subr.mxu0 0.0
    %365 = vmatpush1.msra.mxu0 0.0
    %366 = vmatprep.mubr.f32.mxu0 0.0
    %367 = vmatmul.mubr.f32.gmra.mrb[0].mxu0 0.0
    %v368 = vpop.f32.mrb[0].mxu0
    %v369 = vadd.f32 0.0, %v368
    %v370 = vpop.f32.mrb[0].mxu0
    %v371 = vadd.f32 0.0, %v370
    %372 = vdwg.mxu0
    %373 = vmatprep.subr.mxu0 %v241
    %374 = vmatpush1.msra.mxu0 %v240
    %375 = vmatprep.subr.mxu0 %v245
    %376 = vmatpush1.msra.mxu0 %v244
    %377 = vmatprep.subr.mxu0 %v249
    %378 = vmatpush1.msra.mxu0 %v248
    %379 = vmatprep.subr.mxu0 %v253
    %380 = vmatpush1.msra.mxu0 %v252
    %381 = vmatprep.subr.mxu0 %v257
    %382 = vmatpush1.msra.mxu0 %v256
    %383 = vmatprep.subr.mxu0 %v261
    %384 = vmatpush1.msra.mxu0 %v260
    %385 = vmatprep.subr.mxu0 %v265
    %386 = vmatpush1.msra.mxu0 %v264
    %387 = vmatprep.subr.mxu0 %v269
    %388 = vmatpush1.msra.mxu0 %v268
    %389 = vmatprep.subr.mxu0 %v273
    %390 = vmatpush1.msra.mxu0 %v272
    %391 = vmatprep.subr.mxu0 %v277
    %392 = vmatpush1.msra.mxu0 %v276
    %393 = vmatprep.subr.mxu0 %v281
    %394 = vmatpush1.msra.mxu0 %v280
    %395 = vmatprep.subr.mxu0 %v285
    %396 = vmatpush1.msra.mxu0 %v284
    %397 = vmatprep.subr.mxu0 %v289
    %398 = vmatpush1.msra.mxu0 %v288
    %399 = vmatprep.subr.mxu0 %v293
    %400 = vmatpush1.msra.mxu0 %v292
    %401 = vmatprep.subr.mxu0 %v297
    %402 = vmatpush1.msra.mxu0 %v296
    %403 = vmatprep.subr.mxu0 %v301
    %404 = vmatpush1.msra.mxu0 %v300
    %405 = vmatprep.subr.mxu0 0.0
    %406 = vmatpush1.msra.mxu0 0.0
    %407 = vmatprep.subr.mxu0 0.0
    %408 = vmatpush1.msra.mxu0 0.0
    %409 = vmatprep.subr.mxu0 0.0
    %410 = vmatpush1.msra.mxu0 0.0
    %411 = vmatprep.subr.mxu0 0.0
    %412 = vmatpush1.msra.mxu0 0.0
    %413 = vmatprep.subr.mxu0 0.0
    %414 = vmatpush1.msra.mxu0 0.0
    %415 = vmatprep.subr.mxu0 0.0
    %416 = vmatpush1.msra.mxu0 0.0
    %417 = vmatprep.subr.mxu0 0.0
    %418 = vmatpush1.msra.mxu0 0.0
    %419 = vmatprep.subr.mxu0 0.0
    %420 = vmatpush1.msra.mxu0 0.0
    %421 = vmatprep.subr.mxu0 0.0
    %422 = vmatpush1.msra.mxu0 0.0
    %423 = vmatprep.subr.mxu0 0.0
    %424 = vmatpush1.msra.mxu0 0.0
    %425 = vmatprep.subr.mxu0 0.0
    %426 = vmatpush1.msra.mxu0 0.0
    %427 = vmatprep.subr.mxu0 0.0
    %428 = vmatpush1.msra.mxu0 0.0
    %429 = vmatprep.subr.mxu0 0.0
    %430 = vmatpush1.msra.mxu0 0.0
    %431 = vmatprep.subr.mxu0 0.0
    %432 = vmatpush1.msra.mxu0 0.0
    %433 = vmatprep.subr.mxu0 0.0
    %434 = vmatpush1.msra.mxu0 0.0
    %435 = vmatprep.subr.mxu0 0.0
    %436 = vmatpush1.msra.mxu0 0.0
    %437 = vmatprep.mubr.f32.mxu0 0.0
    %438 = vmatmul.mubr.f32.gmra.mrb[0].mxu0 0.0
    %v439 = vpop.f32.mrb[0].mxu0
    %v440 = vadd.f32 0.0, %v439
    %v441 = vpop.f32.mrb[0].mxu0
    %v442 = vadd.f32 0.0, %v441
    %443 = vdwg.mxu0
    %v444 = vadd.f32 %v163, %v369
    %v445 = vadd.f32 %v165, %v371
    %v446 = vadd.f32 %v234, %v440
    %v447 = vadd.f32 %v236, %v442
    %v448 = vxor.u32 %v444, 2147483648
    %v449 = vxor.u32 %v445, 2147483648
    %v450 = vxor.u32 %v446, 2147483648
    %v451 = vxor.u32 %v447, 2147483648
    %v452 = vmul.f32 %v448, 1.442695
    %v453 = vpow.pop %v452
    %v454 = vmul.f32 %v449, 1.442695
    %v455 = vpow.pop %v454
    %v456 = vmul.f32 %v450, 1.442695
    %v457 = vpow.pop %v456
    %v458 = vmul.f32 %v451, 1.442695
    %v459 = vpow.pop %v458
    %v460 = vadd.f32 %v453, 1.0
    %v461 = vadd.f32 %v455, 1.0
    %v462 = vadd.f32 %v457, 1.0
    %v463 = vadd.f32 %v459, 1.0
    %v464 = vrcp.pop %v460
    %v465 = vmul.f32 1.0, %v464
    %v466 = vrcp.pop %v461
    %v467 = vmul.f32 1.0, %v466
    %v468 = vrcp.pop %v462
    %v469 = vmul.f32 1.0, %v468
    %v470 = vrcp.pop %v463
    %v471 = vmul.f32 1.0, %v470
    %v472 = vmul.f32 %v469, 2.0
    %v473 = vsub.f32 %v472, 1.0
    %v474 = vmul.f32 %v467, 0.0
    %v475 = vmul.f32 %v465, %v473
    %v476 = vadd.f32 %v474, %v475
    %v477 = vtanh.pop %v476
    %v478 = vmul.f32 %v471, %v477
    %479 = vmatprep.subr.mxu0 %v239
    %480 = vmatpush1.msra.mxu0 %v238
    %481 = vmatprep.subr.mxu0 %v243
    %482 = vmatpush1.msra.mxu0 %v242
    %483 = vmatprep.subr.mxu0 %v247
    %484 = vmatpush1.msra.mxu0 %v246
    %485 = vmatprep.subr.mxu0 %v251
    %486 = vmatpush1.msra.mxu0 %v250
    %487 = vmatprep.subr.mxu0 %v255
    %488 = vmatpush1.msra.mxu0 %v254
    %489 = vmatprep.subr.mxu0 %v259
    %490 = vmatpush1.msra.mxu0 %v258
    %491 = vmatprep.subr.mxu0 %v263
    %492 = vmatpush1.msra.mxu0 %v262
    %493 = vmatprep.subr.mxu0 %v267
    %494 = vmatpush1.msra.mxu0 %v266
    %495 = vmatprep.subr.mxu0 %v271
    %496 = vmatpush1.msra.mxu0 %v270
    %497 = vmatprep.subr.mxu0 %v275
    %498 = vmatpush1.msra.mxu0 %v274
    %499 = vmatprep.subr.mxu0 %v279
    %500 = vmatpush1.msra.mxu0 %v278
    %501 = vmatprep.subr.mxu0 %v283
    %502 = vmatpush1.msra.mxu0 %v282
    %503 = vmatprep.subr.mxu0 %v287
    %504 = vmatpush1.msra.mxu0 %v286
    %505 = vmatprep.subr.mxu0 %v291
    %506 = vmatpush1.msra.mxu0 %v290
    %507 = vmatprep.subr.mxu0 %v295
    %508 = vmatpush1.msra.mxu0 %v294
    %509 = vmatprep.subr.mxu0 %v299
    %510 = vmatpush1.msra.mxu0 %v298
    %511 = vmatprep.subr.mxu0 0.0
    %512 = vmatpush1.msra.mxu0 0.0
    %513 = vmatprep.subr.mxu0 0.0
    %514 = vmatpush1.msra.mxu0 0.0
    %515 = vmatprep.subr.mxu0 0.0
    %516 = vmatpush1.msra.mxu0 0.0
    %517 = vmatprep.subr.mxu0 0.0
    %518 = vmatpush1.msra.mxu0 0.0
    %519 = vmatprep.subr.mxu0 0.0
    %520 = vmatpush1.msra.mxu0 0.0
    %521 = vmatprep.subr.mxu0 0.0
    %522 = vmatpush1.msra.mxu0 0.0
    %523 = vmatprep.subr.mxu0 0.0
    %524 = vmatpush1.msra.mxu0 0.0
    %525 = vmatprep.subr.mxu0 0.0
    %526 = vmatpush1.msra.mxu0 0.0
    %527 = vmatprep.subr.mxu0 0.0
    %528 = vmatpush1.msra.mxu0 0.0
    %529 = vmatprep.subr.mxu0 0.0
    %530 = vmatpush1.msra.mxu0 0.0
    %531 = vmatprep.subr.mxu0 0.0
    %532 = vmatpush1.msra.mxu0 0.0
    %533 = vmatprep.subr.mxu0 0.0
    %534 = vmatpush1.msra.mxu0 0.0
    %535 = vmatprep.subr.mxu0 0.0
    %536 = vmatpush1.msra.mxu0 0.0
    %537 = vmatprep.subr.mxu0 0.0
    %538 = vmatpush1.msra.mxu0 0.0
    %539 = vmatprep.subr.mxu0 0.0
    %540 = vmatpush1.msra.mxu0 0.0
    %541 = vmatprep.subr.mxu0 0.0
    %542 = vmatpush1.msra.mxu0 0.0
    %543 = vmatprep.mubr.f32.mxu0 0.0
    %544 = vmatmul.mubr.f32.gmra.mrb[0].mxu0 %v478
    %v545 = vpop.f32.mrb[0].mxu0
    %v546 = vadd.f32 0.0, %v545
    %v547 = vpop.f32.mrb[0].mxu0
    %v548 = vadd.f32 0.0, %v547
    %549 = vdwg.mxu0
    %550 = vmatprep.subr.mxu0 %v241
    %551 = vmatpush1.msra.mxu0 %v240
    %552 = vmatprep.subr.mxu0 %v245
    %553 = vmatpush1.msra.mxu0 %v244
    %554 = vmatprep.subr.mxu0 %v249
    %555 = vmatpush1.msra.mxu0 %v248
    %556 = vmatprep.subr.mxu0 %v253
    %557 = vmatpush1.msra.mxu0 %v252
    %558 = vmatprep.subr.mxu0 %v257
    %559 = vmatpush1.msra.mxu0 %v256
    %560 = vmatprep.subr.mxu0 %v261
    %561 = vmatpush1.msra.mxu0 %v260
    %562 = vmatprep.subr.mxu0 %v265
    %563 = vmatpush1.msra.mxu0 %v264
    %564 = vmatprep.subr.mxu0 %v269
    %565 = vmatpush1.msra.mxu0 %v268
    %566 = vmatprep.subr.mxu0 %v273
    %567 = vmatpush1.msra.mxu0 %v272
    %568 = vmatprep.subr.mxu0 %v277
    %569 = vmatpush1.msra.mxu0 %v276
    %570 = vmatprep.subr.mxu0 %v281
    %571 = vmatpush1.msra.mxu0 %v280
    %572 = vmatprep.subr.mxu0 %v285
    %573 = vmatpush1.msra.mxu0 %v284
    %574 = vmatprep.subr.mxu0 %v289
    %575 = vmatpush1.msra.mxu0 %v288
    %576 = vmatprep.subr.mxu0 %v293
    %577 = vmatpush1.msra.mxu0 %v292
    %578 = vmatprep.subr.mxu0 %v297
    %579 = vmatpush1.msra.mxu0 %v296
    %580 = vmatprep.subr.mxu0 %v301
    %581 = vmatpush1.msra.mxu0 %v300
    %582 = vmatprep.subr.mxu0 0.0
    %583 = vmatpush1.msra.mxu0 0.0
    %584 = vmatprep.subr.mxu0 0.0
    %585 = vmatpush1.msra.mxu0 0.0
    %586 = vmatprep.subr.mxu0 0.0
    %587 = vmatpush1.msra.mxu0 0.0
    %588 = vmatprep.subr.mxu0 0.0
    %589 = vmatpush1.msra.mxu0 0.0
    %590 = vmatprep.subr.mxu0 0.0
    %591 = vmatpush1.msra.mxu0 0.0
    %592 = vmatprep.subr.mxu0 0.0
    %593 = vmatpush1.msra.mxu0 0.0
    %594 = vmatprep.subr.mxu0 0.0
    %595 = vmatpush1.msra.mxu0 0.0
    %596 = vmatprep.subr.mxu0 0.0
    %597 = vmatpush1.msra.mxu0 0.0
    %598 = vmatprep.subr.mxu0 0.0
    %599 = vmatpush1.msra.mxu0 0.0
    %600 = vmatprep.subr.mxu0 0.0
    %601 = vmatpush1.msra.mxu0 0.0
    %602 = vmatprep.subr.mxu0 0.0
    %603 = vmatpush1.msra.mxu0 0.0
    %604 = vmatprep.subr.mxu0 0.0
    %605 = vmatpush1.msra.mxu0 0.0
    %606 = vmatprep.subr.mxu0 0.0
    %607 = vmatpush1.msra.mxu0 0.0
    %608 = vmatprep.subr.mxu0 0.0
    %609 = vmatpush1.msra.mxu0 0.0
    %610 = vmatprep.subr.mxu0 0.0
    %611 = vmatpush1.msra.mxu0 0.0
    %612 = vmatprep.subr.mxu0 0.0
    %613 = vmatpush1.msra.mxu0 0.0
    %614 = vmatprep.mubr.f32.mxu0 0.0
    %615 = vmatmul.mubr.f32.gmra.mrb[0].mxu0 %v478
    %v616 = vpop.f32.mrb[0].mxu0
    %v617 = vadd.f32 0.0, %v616
    %v618 = vpop.f32.mrb[0].mxu0
    %v619 = vadd.f32 0.0, %v618
    %620 = vdwg.mxu0
    %v625 = vrot.slane %v546, 7
    %v626 = vrot.slane %v548, 7
    %v627 = vrot.slane %v617, 7
    %v628 = vrot.slane %v619, 7
    %v633 = vadd.f32 %v163, %v625
    %v634 = vadd.f32 %v165, %v626
    %v635 = vadd.f32 %v234, %v627
    %v636 = vadd.f32 %v236, %v628
    %v637 = vxor.u32 %v633, 2147483648
    %v638 = vxor.u32 %v634, 2147483648
    %v639 = vxor.u32 %v635, 2147483648
    %v640 = vxor.u32 %v636, 2147483648
    %v641 = vmul.f32 %v637, 1.442695
    %v642 = vpow.pop %v641
    %v643 = vmul.f32 %v638, 1.442695
    %v644 = vpow.pop %v643
    %v645 = vmul.f32 %v639, 1.442695
    %v646 = vpow.pop %v645
    %v647 = vmul.f32 %v640, 1.442695
    %v648 = vpow.pop %v647
    %v649 = vadd.f32 %v642, 1.0
    %v650 = vadd.f32 %v644, 1.0
    %v651 = vadd.f32 %v646, 1.0
    %v652 = vadd.f32 %v648, 1.0
    %v653 = vrcp.pop %v649
    %v654 = vmul.f32 1.0, %v653
    %v655 = vrcp.pop %v650
    %v656 = vmul.f32 1.0, %v655
    %v657 = vrcp.pop %v651
    %v658 = vmul.f32 1.0, %v657
    %v659 = vrcp.pop %v652
    %v660 = vmul.f32 1.0, %v659
    %v661 = vmul.f32 %v658, 2.0
    %v662 = vsub.f32 %v661, 1.0
    %v664 = vrot.slane %v476, 7
    %v666 = vmul.f32 %v656, %v664
    %v667 = vmul.f32 %v654, %v662
    %v668 = vadd.f32 %v666, %v667
    %v669 = vtanh.pop %v668
    %v670 = vmul.f32 %v660, %v669
    %v672 = vrot.slane %v670, 1
    %674 = vmatprep.subr.mxu0 %v239
    %675 = vmatpush1.msra.mxu0 %v238
    %676 = vmatprep.subr.mxu0 %v243
    %677 = vmatpush1.msra.mxu0 %v242
    %678 = vmatprep.subr.mxu0 %v247
    %679 = vmatpush1.msra.mxu0 %v246
    %680 = vmatprep.subr.mxu0 %v251
    %681 = vmatpush1.msra.mxu0 %v250
    %682 = vmatprep.subr.mxu0 %v255
    %683 = vmatpush1.msra.mxu0 %v254
    %684 = vmatprep.subr.mxu0 %v259
    %685 = vmatpush1.msra.mxu0 %v258
    %686 = vmatprep.subr.mxu0 %v263
    %687 = vmatpush1.msra.mxu0 %v262
    %688 = vmatprep.subr.mxu0 %v267
    %689 = vmatpush1.msra.mxu0 %v266
    %690 = vmatprep.subr.mxu0 %v271
    %691 = vmatpush1.msra.mxu0 %v270
    %692 = vmatprep.subr.mxu0 %v275
    %693 = vmatpush1.msra.mxu0 %v274
    %694 = vmatprep.subr.mxu0 %v279
    %695 = vmatpush1.msra.mxu0 %v278
    %696 = vmatprep.subr.mxu0 %v283
    %697 = vmatpush1.msra.mxu0 %v282
    %698 = vmatprep.subr.mxu0 %v287
    %699 = vmatpush1.msra.mxu0 %v286
    %700 = vmatprep.subr.mxu0 %v291
    %701 = vmatpush1.msra.mxu0 %v290
    %702 = vmatprep.subr.mxu0 %v295
    %703 = vmatpush1.msra.mxu0 %v294
    %704 = vmatprep.subr.mxu0 %v299
    %705 = vmatpush1.msra.mxu0 %v298
    %706 = vmatprep.subr.mxu0 0.0
    %707 = vmatpush1.msra.mxu0 0.0
    %708 = vmatprep.subr.mxu0 0.0
    %709 = vmatpush1.msra.mxu0 0.0
    %710 = vmatprep.subr.mxu0 0.0
    %711 = vmatpush1.msra.mxu0 0.0
    %712 = vmatprep.subr.mxu0 0.0
    %713 = vmatpush1.msra.mxu0 0.0
    %714 = vmatprep.subr.mxu0 0.0
    %715 = vmatpush1.msra.mxu0 0.0
    %716 = vmatprep.subr.mxu0 0.0
    %717 = vmatpush1.msra.mxu0 0.0
    %718 = vmatprep.subr.mxu0 0.0
    %719 = vmatpush1.msra.mxu0 0.0
    %720 = vmatprep.subr.mxu0 0.0
    %721 = vmatpush1.msra.mxu0 0.0
    %722 = vmatprep.subr.mxu0 0.0
    %723 = vmatpush1.msra.mxu0 0.0
    %724 = vmatprep.subr.mxu0 0.0
    %725 = vmatpush1.msra.mxu0 0.0
    %726 = vmatprep.subr.mxu0 0.0
    %727 = vmatpush1.msra.mxu0 0.0
    %728 = vmatprep.subr.mxu0 0.0
    %729 = vmatpush1.msra.mxu0 0.0
    %730 = vmatprep.subr.mxu0 0.0
    %731 = vmatpush1.msra.mxu0 0.0
    %732 = vmatprep.subr.mxu0 0.0
    %733 = vmatpush1.msra.mxu0 0.0
    %734 = vmatprep.subr.mxu0 0.0
    %735 = vmatpush1.msra.mxu0 0.0
    %736 = vmatprep.subr.mxu0 0.0
    %737 = vmatpush1.msra.mxu0 0.0
    %738 = vmatprep.mubr.f32.mxu0 0.0
    %739 = vmatmul.mubr.f32.gmra.mrb[0].mxu0 %v672
    %v740 = vpop.f32.mrb[0].mxu0
    %v741 = vadd.f32 0.0, %v740
    %v742 = vpop.f32.mrb[0].mxu0
    %v743 = vadd.f32 0.0, %v742
    %744 = vdwg.mxu0
    %745 = vmatprep.subr.mxu0 %v241
    %746 = vmatpush1.msra.mxu0 %v240
    %747 = vmatprep.subr.mxu0 %v245
    %748 = vmatpush1.msra.mxu0 %v244
    %749 = vmatprep.subr.mxu0 %v249
    %750 = vmatpush1.msra.mxu0 %v248
    %751 = vmatprep.subr.mxu0 %v253
    %752 = vmatpush1.msra.mxu0 %v252
    %753 = vmatprep.subr.mxu0 %v257
    %754 = vmatpush1.msra.mxu0 %v256
    %755 = vmatprep.subr.mxu0 %v261
    %756 = vmatpush1.msra.mxu0 %v260
    %757 = vmatprep.subr.mxu0 %v265
    %758 = vmatpush1.msra.mxu0 %v264
    %759 = vmatprep.subr.mxu0 %v269
    %760 = vmatpush1.msra.mxu0 %v268
    %761 = vmatprep.subr.mxu0 %v273
    %762 = vmatpush1.msra.mxu0 %v272
    %763 = vmatprep.subr.mxu0 %v277
    %764 = vmatpush1.msra.mxu0 %v276
    %765 = vmatprep.subr.mxu0 %v281
    %766 = vmatpush1.msra.mxu0 %v280
    %767 = vmatprep.subr.mxu0 %v285
    %768 = vmatpush1.msra.mxu0 %v284
    %769 = vmatprep.subr.mxu0 %v289
    %770 = vmatpush1.msra.mxu0 %v288
    %771 = vmatprep.subr.mxu0 %v293
    %772 = vmatpush1.msra.mxu0 %v292
    %773 = vmatprep.subr.mxu0 %v297
    %774 = vmatpush1.msra.mxu0 %v296
    %775 = vmatprep.subr.mxu0 %v301
    %776 = vmatpush1.msra.mxu0 %v300
    %777 = vmatprep.subr.mxu0 0.0
    %778 = vmatpush1.msra.mxu0 0.0
    %779 = vmatprep.subr.mxu0 0.0
    %780 = vmatpush1.msra.mxu0 0.0
    %781 = vmatprep.subr.mxu0 0.0
    %782 = vmatpush1.msra.mxu0 0.0
    %783 = vmatprep.subr.mxu0 0.0
    %784 = vmatpush1.msra.mxu0 0.0
    %785 = vmatprep.subr.mxu0 0.0
    %786 = vmatpush1.msra.mxu0 0.0
    %787 = vmatprep.subr.mxu0 0.0
    %788 = vmatpush1.msra.mxu0 0.0
    %789 = vmatprep.subr.mxu0 0.0
    %790 = vmatpush1.msra.mxu0 0.0
    %791 = vmatprep.subr.mxu0 0.0
    %792 = vmatpush1.msra.mxu0 0.0
    %793 = vmatprep.subr.mxu0 0.0
    %794 = vmatpush1.msra.mxu0 0.0
    %795 = vmatprep.subr.mxu0 0.0
    %796 = vmatpush1.msra.mxu0 0.0
    %797 = vmatprep.subr.mxu0 0.0
    %798 = vmatpush1.msra.mxu0 0.0
    %799 = vmatprep.subr.mxu0 0.0
    %800 = vmatpush1.msra.mxu0 0.0
    %801 = vmatprep.subr.mxu0 0.0
    %802 = vmatpush1.msra.mxu0 0.0
    %803 = vmatprep.subr.mxu0 0.0
    %804 = vmatpush1.msra.mxu0 0.0
    %805 = vmatprep.subr.mxu0 0.0
    %806 = vmatpush1.msra.mxu0 0.0
    %807 = vmatprep.subr.mxu0 0.0
    %808 = vmatpush1.msra.mxu0 0.0
    %809 = vmatprep.mubr.f32.mxu0 0.0
    %810 = vmatmul.mubr.f32.gmra.mrb[0].mxu0 %v672
    %v811 = vpop.f32.mrb[0].mxu0
    %v812 = vadd.f32 0.0, %v811
    %v813 = vpop.f32.mrb[0].mxu0
    %v814 = vadd.f32 0.0, %v813
    %815 = vdwg.mxu0
    %v820 = vrot.slane %v741, 6
    %v821 = vrot.slane %v743, 6
    %v822 = vrot.slane %v812, 6
    %v823 = vrot.slane %v814, 6
    %v828 = vadd.f32 %v163, %v820
    %v829 = vadd.f32 %v165, %v821
    %v830 = vadd.f32 %v234, %v822
    %v831 = vadd.f32 %v236, %v823
    %v832 = vxor.u32 %v828, 2147483648
    %v833 = vxor.u32 %v829, 2147483648
    %v834 = vxor.u32 %v830, 2147483648
    %v835 = vxor.u32 %v831, 2147483648
    %v836 = vmul.f32 %v832, 1.442695
    %v837 = vpow.pop %v836
    %v838 = vmul.f32 %v833, 1.442695
    %v839 = vpow.pop %v838
    %v840 = vmul.f32 %v834, 1.442695
    %v841 = vpow.pop %v840
    %v842 = vmul.f32 %v835, 1.442695
    %v843 = vpow.pop %v842
    %v844 = vadd.f32 %v837, 1.0
    %v845 = vadd.f32 %v839, 1.0
    %v846 = vadd.f32 %v841, 1.0
    %v847 = vadd.f32 %v843, 1.0
    %v848 = vrcp.pop %v844
    %v849 = vmul.f32 1.0, %v848
    %v850 = vrcp.pop %v845
    %v851 = vmul.f32 1.0, %v850
    %v852 = vrcp.pop %v846
    %v853 = vmul.f32 1.0, %v852
    %v854 = vrcp.pop %v847
    %v855 = vmul.f32 1.0, %v854
    %v856 = vmul.f32 %v853, 2.0
    %v857 = vsub.f32 %v856, 1.0
    %v859 = vrot.slane %v668, 7
    %v861 = vmul.f32 %v851, %v859
    %v862 = vmul.f32 %v849, %v857
    %v863 = vadd.f32 %v861, %v862
    %v864 = vtanh.pop %v863
    %v865 = vmul.f32 %v855, %v864
    %v867 = vrot.slane %v865, 2
    %869 = vmatprep.subr.mxu0 %v239
    %870 = vmatpush1.msra.mxu0 %v238
    %871 = vmatprep.subr.mxu0 %v243
    %872 = vmatpush1.msra.mxu0 %v242
    %873 = vmatprep.subr.mxu0 %v247
    %874 = vmatpush1.msra.mxu0 %v246
    %875 = vmatprep.subr.mxu0 %v251
    %876 = vmatpush1.msra.mxu0 %v250
    %877 = vmatprep.subr.mxu0 %v255
    %878 = vmatpush1.msra.mxu0 %v254
    %879 = vmatprep.subr.mxu0 %v259
    %880 = vmatpush1.msra.mxu0 %v258
    %881 = vmatprep.subr.mxu0 %v263
    %882 = vmatpush1.msra.mxu0 %v262
    %883 = vmatprep.subr.mxu0 %v267
    %884 = vmatpush1.msra.mxu0 %v266
    %885 = vmatprep.subr.mxu0 %v271
    %886 = vmatpush1.msra.mxu0 %v270
    %887 = vmatprep.subr.mxu0 %v275
    %888 = vmatpush1.msra.mxu0 %v274
    %889 = vmatprep.subr.mxu0 %v279
    %890 = vmatpush1.msra.mxu0 %v278
    %891 = vmatprep.subr.mxu0 %v283
    %892 = vmatpush1.msra.mxu0 %v282
    %893 = vmatprep.subr.mxu0 %v287
    %894 = vmatpush1.msra.mxu0 %v286
    %895 = vmatprep.subr.mxu0 %v291
    %896 = vmatpush1.msra.mxu0 %v290
    %897 = vmatprep.subr.mxu0 %v295
    %898 = vmatpush1.msra.mxu0 %v294
    %899 = vmatprep.subr.mxu0 %v299
    %900 = vmatpush1.msra.mxu0 %v298
    %901 = vmatprep.subr.mxu0 0.0
    %902 = vmatpush1.msra.mxu0 0.0
    %903 = vmatprep.subr.mxu0 0.0
    %904 = vmatpush1.msra.mxu0 0.0
    %905 = vmatprep.subr.mxu0 0.0
    %906 = vmatpush1.msra.mxu0 0.0
    %907 = vmatprep.subr.mxu0 0.0
    %908 = vmatpush1.msra.mxu0 0.0
    %909 = vmatprep.subr.mxu0 0.0
    %910 = vmatpush1.msra.mxu0 0.0
    %911 = vmatprep.subr.mxu0 0.0
    %912 = vmatpush1.msra.mxu0 0.0
    %913 = vmatprep.subr.mxu0 0.0
    %914 = vmatpush1.msra.mxu0 0.0
    %915 = vmatprep.subr.mxu0 0.0
    %916 = vmatpush1.msra.mxu0 0.0
    %917 = vmatprep.subr.mxu0 0.0
    %918 = vmatpush1.msra.mxu0 0.0
    %919 = vmatprep.subr.mxu0 0.0
    %920 = vmatpush1.msra.mxu0 0.0
    %921 = vmatprep.subr.mxu0 0.0
    %922 = vmatpush1.msra.mxu0 0.0
    %923 = vmatprep.subr.mxu0 0.0
    %924 = vmatpush1.msra.mxu0 0.0
    %925 = vmatprep.subr.mxu0 0.0
    %926 = vmatpush1.msra.mxu0 0.0
    %927 = vmatprep.subr.mxu0 0.0
    %928 = vmatpush1.msra.mxu0 0.0
    %929 = vmatprep.subr.mxu0 0.0
    %930 = vmatpush1.msra.mxu0 0.0
    %931 = vmatprep.subr.mxu0 0.0
    %932 = vmatpush1.msra.mxu0 0.0
    %933 = vmatprep.mubr.f32.mxu0 0.0
    %934 = vmatmul.mubr.f32.gmra.mrb[0].mxu0 %v867
    %v935 = vpop.f32.mrb[0].mxu0
    %v936 = vadd.f32 0.0, %v935
    %v937 = vpop.f32.mrb[0].mxu0
    %v938 = vadd.f32 0.0, %v937
    %939 = vdwg.mxu0
    %940 = vmatprep.subr.mxu0 %v241
    %941 = vmatpush1.msra.mxu0 %v240
    %942 = vmatprep.subr.mxu0 %v245
    %943 = vmatpush1.msra.mxu0 %v244
    %944 = vmatprep.subr.mxu0 %v249
    %945 = vmatpush1.msra.mxu0 %v248
    %946 = vmatprep.subr.mxu0 %v253
    %947 = vmatpush1.msra.mxu0 %v252
    %948 = vmatprep.subr.mxu0 %v257
    %949 = vmatpush1.msra.mxu0 %v256
    %950 = vmatprep.subr.mxu0 %v261
    %951 = vmatpush1.msra.mxu0 %v260
    %952 = vmatprep.subr.mxu0 %v265
    %953 = vmatpush1.msra.mxu0 %v264
    %954 = vmatprep.subr.mxu0 %v269
    %955 = vmatpush1.msra.mxu0 %v268
    %956 = vmatprep.subr.mxu0 %v273
    %957 = vmatpush1.msra.mxu0 %v272
    %958 = vmatprep.subr.mxu0 %v277
    %959 = vmatpush1.msra.mxu0 %v276
    %960 = vmatprep.subr.mxu0 %v281
    %961 = vmatpush1.msra.mxu0 %v280
    %962 = vmatprep.subr.mxu0 %v285
    %963 = vmatpush1.msra.mxu0 %v284
    %964 = vmatprep.subr.mxu0 %v289
    %965 = vmatpush1.msra.mxu0 %v288
    %966 = vmatprep.subr.mxu0 %v293
    %967 = vmatpush1.msra.mxu0 %v292
    %968 = vmatprep.subr.mxu0 %v297
    %969 = vmatpush1.msra.mxu0 %v296
    %970 = vmatprep.subr.mxu0 %v301
    %971 = vmatpush1.msra.mxu0 %v300
    %972 = vmatprep.subr.mxu0 0.0
    %973 = vmatpush1.msra.mxu0 0.0
    %974 = vmatprep.subr.mxu0 0.0
    %975 = vmatpush1.msra.mxu0 0.0
    %976 = vmatprep.subr.mxu0 0.0
    %977 = vmatpush1.msra.mxu0 0.0
    %978 = vmatprep.subr.mxu0 0.0
    %979 = vmatpush1.msra.mxu0 0.0
    %980 = vmatprep.subr.mxu0 0.0
    %981 = vmatpush1.msra.mxu0 0.0
    %982 = vmatprep.subr.mxu0 0.0
    %983 = vmatpush1.msra.mxu0 0.0
    %984 = vmatprep.subr.mxu0 0.0
    %985 = vmatpush1.msra.mxu0 0.0
    %986 = vmatprep.subr.mxu0 0.0
    %987 = vmatpush1.msra.mxu0 0.0
    %988 = vmatprep.subr.mxu0 0.0
    %989 = vmatpush1.msra.mxu0 0.0
    %990 = vmatprep.subr.mxu0 0.0
    %991 = vmatpush1.msra.mxu0 0.0
    %992 = vmatprep.subr.mxu0 0.0
    %993 = vmatpush1.msra.mxu0 0.0
    %994 = vmatprep.subr.mxu0 0.0
    %995 = vmatpush1.msra.mxu0 0.0
    %996 = vmatprep.subr.mxu0 0.0
    %997 = vmatpush1.msra.mxu0 0.0
    %998 = vmatprep.subr.mxu0 0.0
    %999 = vmatpush1.msra.mxu0 0.0
    %1000 = vmatprep.subr.mxu0 0.0
    %1001 = vmatpush1.msra.mxu0 0.0
    %1002 = vmatprep.subr.mxu0 0.0
    %1003 = vmatpush1.msra.mxu0 0.0
    %1004 = vmatprep.mubr.f32.mxu0 0.0
    %1005 = vmatmul.mubr.f32.gmra.mrb[0].mxu0 %v867
    %v1006 = vpop.f32.mrb[0].mxu0
    %v1007 = vadd.f32 0.0, %v1006
    %v1008 = vpop.f32.mrb[0].mxu0
    %v1009 = vadd.f32 0.0, %v1008
    %1010 = vdwg.mxu0
    %v1015 = vrot.slane %v936, 5
    %v1016 = vrot.slane %v938, 5
    %v1017 = vrot.slane %v1007, 5
    %v1018 = vrot.slane %v1009, 5
    %v1023 = vadd.f32 %v163, %v1015
    %v1024 = vadd.f32 %v165, %v1016
    %v1025 = vadd.f32 %v234, %v1017
    %v1026 = vadd.f32 %v236, %v1018
    %v1027 = vxor.u32 %v1023, 2147483648
    %v1028 = vxor.u32 %v1024, 2147483648
    %v1029 = vxor.u32 %v1025, 2147483648
    %v1030 = vxor.u32 %v1026, 2147483648
    %v1031 = vmul.f32 %v1027, 1.442695
    %v1032 = vpow.pop %v1031
    %v1033 = vmul.f32 %v1028, 1.442695
    %v1034 = vpow.pop %v1033
    %v1035 = vmul.f32 %v1029, 1.442695
    %v1036 = vpow.pop %v1035
    %v1037 = vmul.f32 %v1030, 1.442695
    %v1038 = vpow.pop %v1037
    %v1039 = vadd.f32 %v1032, 1.0
    %v1040 = vadd.f32 %v1034, 1.0
    %v1041 = vadd.f32 %v1036, 1.0
    %v1042 = vadd.f32 %v1038, 1.0
    %v1043 = vrcp.pop %v1039
    %v1044 = vmul.f32 1.0, %v1043
    %v1045 = vrcp.pop %v1040
    %v1046 = vmul.f32 1.0, %v1045
    %v1047 = vrcp.pop %v1041
    %v1048 = vmul.f32 1.0, %v1047
    %v1049 = vrcp.pop %v1042
    %v1050 = vmul.f32 1.0, %v1049
    %v1051 = vmul.f32 %v1048, 2.0
    %v1052 = vsub.f32 %v1051, 1.0
    %v1054 = vrot.slane %v863, 7
    %v1056 = vmul.f32 %v1046, %v1054
    %v1057 = vmul.f32 %v1044, %v1052
    %v1058 = vadd.f32 %v1056, %v1057
    %v1059 = vtanh.pop %v1058
    %v1060 = vmul.f32 %v1050, %v1059
    %v1062 = vrot.slane %v1060, 3
    %1064 = vmatprep.subr.mxu0 %v239
    %1065 = vmatpush1.msra.mxu0 %v238
    %1066 = vmatprep.subr.mxu0 %v243
    %1067 = vmatpush1.msra.mxu0 %v242
    %1068 = vmatprep.subr.mxu0 %v247
    %1069 = vmatpush1.msra.mxu0 %v246
    %1070 = vmatprep.subr.mxu0 %v251
    %1071 = vmatpush1.msra.mxu0 %v250
    %1072 = vmatprep.subr.mxu0 %v255
    %1073 = vmatpush1.msra.mxu0 %v254
    %1074 = vmatprep.subr.mxu0 %v259
    %1075 = vmatpush1.msra.mxu0 %v258
    %1076 = vmatprep.subr.mxu0 %v263
    %1077 = vmatpush1.msra.mxu0 %v262
    %1078 = vmatprep.subr.mxu0 %v267
    %1079 = vmatpush1.msra.mxu0 %v266
    %1080 = vmatprep.subr.mxu0 %v271
    %1081 = vmatpush1.msra.mxu0 %v270
    %1082 = vmatprep.subr.mxu0 %v275
    %1083 = vmatpush1.msra.mxu0 %v274
    %1084 = vmatprep.subr.mxu0 %v279
    %1085 = vmatpush1.msra.mxu0 %v278
    %1086 = vmatprep.subr.mxu0 %v283
    %1087 = vmatpush1.msra.mxu0 %v282
    %1088 = vmatprep.subr.mxu0 %v287
    %1089 = vmatpush1.msra.mxu0 %v286
    %1090 = vmatprep.subr.mxu0 %v291
    %1091 = vmatpush1.msra.mxu0 %v290
    %1092 = vmatprep.subr.mxu0 %v295
    %1093 = vmatpush1.msra.mxu0 %v294
    %1094 = vmatprep.subr.mxu0 %v299
    %1095 = vmatpush1.msra.mxu0 %v298
    %1096 = vmatprep.subr.mxu0 0.0
    %1097 = vmatpush1.msra.mxu0 0.0
    %1098 = vmatprep.subr.mxu0 0.0
    %1099 = vmatpush1.msra.mxu0 0.0
    %1100 = vmatprep.subr.mxu0 0.0
    %1101 = vmatpush1.msra.mxu0 0.0
    %1102 = vmatprep.subr.mxu0 0.0
    %1103 = vmatpush1.msra.mxu0 0.0
    %1104 = vmatprep.subr.mxu0 0.0
    %1105 = vmatpush1.msra.mxu0 0.0
    %1106 = vmatprep.subr.mxu0 0.0
    %1107 = vmatpush1.msra.mxu0 0.0
    %1108 = vmatprep.subr.mxu0 0.0
    %1109 = vmatpush1.msra.mxu0 0.0
    %1110 = vmatprep.subr.mxu0 0.0
    %1111 = vmatpush1.msra.mxu0 0.0
    %1112 = vmatprep.subr.mxu0 0.0
    %1113 = vmatpush1.msra.mxu0 0.0
    %1114 = vmatprep.subr.mxu0 0.0
    %1115 = vmatpush1.msra.mxu0 0.0
    %1116 = vmatprep.subr.mxu0 0.0
    %1117 = vmatpush1.msra.mxu0 0.0
    %1118 = vmatprep.subr.mxu0 0.0
    %1119 = vmatpush1.msra.mxu0 0.0
    %1120 = vmatprep.subr.mxu0 0.0
    %1121 = vmatpush1.msra.mxu0 0.0
    %1122 = vmatprep.subr.mxu0 0.0
    %1123 = vmatpush1.msra.mxu0 0.0
    %1124 = vmatprep.subr.mxu0 0.0
    %1125 = vmatpush1.msra.mxu0 0.0
    %1126 = vmatprep.subr.mxu0 0.0
    %1127 = vmatpush1.msra.mxu0 0.0
    %1128 = vmatprep.mubr.f32.mxu0 0.0
    %1129 = vmatmul.mubr.f32.gmra.mrb[0].mxu0 %v1062
    %v1130 = vpop.f32.mrb[0].mxu0
    %v1131 = vadd.f32 0.0, %v1130
    %v1132 = vpop.f32.mrb[0].mxu0
    %v1133 = vadd.f32 0.0, %v1132
    %1134 = vdwg.mxu0
    %1135 = vmatprep.subr.mxu0 %v241
    %1136 = vmatpush1.msra.mxu0 %v240
    %1137 = vmatprep.subr.mxu0 %v245
    %1138 = vmatpush1.msra.mxu0 %v244
    %1139 = vmatprep.subr.mxu0 %v249
    %1140 = vmatpush1.msra.mxu0 %v248
    %1141 = vmatprep.subr.mxu0 %v253
    %1142 = vmatpush1.msra.mxu0 %v252
    %1143 = vmatprep.subr.mxu0 %v257
    %1144 = vmatpush1.msra.mxu0 %v256
    %1145 = vmatprep.subr.mxu0 %v261
    %1146 = vmatpush1.msra.mxu0 %v260
    %1147 = vmatprep.subr.mxu0 %v265
    %1148 = vmatpush1.msra.mxu0 %v264
    %1149 = vmatprep.subr.mxu0 %v269
    %1150 = vmatpush1.msra.mxu0 %v268
    %1151 = vmatprep.subr.mxu0 %v273
    %1152 = vmatpush1.msra.mxu0 %v272
    %1153 = vmatprep.subr.mxu0 %v277
    %1154 = vmatpush1.msra.mxu0 %v276
    %1155 = vmatprep.subr.mxu0 %v281
    %1156 = vmatpush1.msra.mxu0 %v280
    %1157 = vmatprep.subr.mxu0 %v285
    %1158 = vmatpush1.msra.mxu0 %v284
    %1159 = vmatprep.subr.mxu0 %v289
    %1160 = vmatpush1.msra.mxu0 %v288
    %1161 = vmatprep.subr.mxu0 %v293
    %1162 = vmatpush1.msra.mxu0 %v292
    %1163 = vmatprep.subr.mxu0 %v297
    %1164 = vmatpush1.msra.mxu0 %v296
    %1165 = vmatprep.subr.mxu0 %v301
    %1166 = vmatpush1.msra.mxu0 %v300
    %1167 = vmatprep.subr.mxu0 0.0
    %1168 = vmatpush1.msra.mxu0 0.0
    %1169 = vmatprep.subr.mxu0 0.0
    %1170 = vmatpush1.msra.mxu0 0.0
    %1171 = vmatprep.subr.mxu0 0.0
    %1172 = vmatpush1.msra.mxu0 0.0
    %1173 = vmatprep.subr.mxu0 0.0
    %1174 = vmatpush1.msra.mxu0 0.0
    %1175 = vmatprep.subr.mxu0 0.0
    %1176 = vmatpush1.msra.mxu0 0.0
    %1177 = vmatprep.subr.mxu0 0.0
    %1178 = vmatpush1.msra.mxu0 0.0
    %1179 = vmatprep.subr.mxu0 0.0
    %1180 = vmatpush1.msra.mxu0 0.0
    %1181 = vmatprep.subr.mxu0 0.0
    %1182 = vmatpush1.msra.mxu0 0.0
    %1183 = vmatprep.subr.mxu0 0.0
    %1184 = vmatpush1.msra.mxu0 0.0
    %1185 = vmatprep.subr.mxu0 0.0
    %1186 = vmatpush1.msra.mxu0 0.0
    %1187 = vmatprep.subr.mxu0 0.0
    %1188 = vmatpush1.msra.mxu0 0.0
    %1189 = vmatprep.subr.mxu0 0.0
    %1190 = vmatpush1.msra.mxu0 0.0
    %1191 = vmatprep.subr.mxu0 0.0
    %1192 = vmatpush1.msra.mxu0 0.0
    %1193 = vmatprep.subr.mxu0 0.0
    %1194 = vmatpush1.msra.mxu0 0.0
    %1195 = vmatprep.subr.mxu0 0.0
    %1196 = vmatpush1.msra.mxu0 0.0
    %1197 = vmatprep.subr.mxu0 0.0
    %1198 = vmatpush1.msra.mxu0 0.0
    %1199 = vmatprep.mubr.f32.mxu0 0.0
    %1200 = vmatmul.mubr.f32.gmra.mrb[0].mxu0 %v1062
    %v1201 = vpop.f32.mrb[0].mxu0
    %v1202 = vadd.f32 0.0, %v1201
    %v1203 = vpop.f32.mrb[0].mxu0
    %v1204 = vadd.f32 0.0, %v1203
    %1205 = vdwg.mxu0
    %v1210 = vrot.slane %v1131, 4
    %v1211 = vrot.slane %v1133, 4
    %v1212 = vrot.slane %v1202, 4
    %v1213 = vrot.slane %v1204, 4
    %v1218 = vadd.f32 %v163, %v1210
    %v1219 = vadd.f32 %v165, %v1211
    %v1220 = vadd.f32 %v234, %v1212
    %v1221 = vadd.f32 %v236, %v1213
    %v1222 = vxor.u32 %v1218, 2147483648
    %v1223 = vxor.u32 %v1219, 2147483648
    %v1224 = vxor.u32 %v1220, 2147483648
    %v1225 = vxor.u32 %v1221, 2147483648
    %v1226 = vmul.f32 %v1222, 1.442695
    %v1227 = vpow.pop %v1226
    %v1228 = vmul.f32 %v1223, 1.442695
    %v1229 = vpow.pop %v1228
    %v1230 = vmul.f32 %v1224, 1.442695
    %v1231 = vpow.pop %v1230
    %v1232 = vmul.f32 %v1225, 1.442695
    %v1233 = vpow.pop %v1232
    %v1234 = vadd.f32 %v1227, 1.0
    %v1235 = vadd.f32 %v1229, 1.0
    %v1236 = vadd.f32 %v1231, 1.0
    %v1237 = vadd.f32 %v1233, 1.0
    %v1238 = vrcp.pop %v1234
    %v1239 = vmul.f32 1.0, %v1238
    %v1240 = vrcp.pop %v1235
    %v1241 = vmul.f32 1.0, %v1240
    %v1242 = vrcp.pop %v1236
    %v1243 = vmul.f32 1.0, %v1242
    %v1244 = vrcp.pop %v1237
    %v1245 = vmul.f32 1.0, %v1244
    %v1246 = vmul.f32 %v1243, 2.0
    %v1247 = vsub.f32 %v1246, 1.0
    %v1249 = vrot.slane %v1058, 7
    %v1251 = vmul.f32 %v1241, %v1249
    %v1252 = vmul.f32 %v1239, %v1247
    %v1253 = vadd.f32 %v1251, %v1252
    %v1254 = vtanh.pop %v1253
    %v1255 = vmul.f32 %v1245, %v1254
    %v1257 = vrot.slane %v1255, 4
    %1259 = vmatprep.subr.mxu0 %v239
    %1260 = vmatpush1.msra.mxu0 %v238
    %1261 = vmatprep.subr.mxu0 %v243
    %1262 = vmatpush1.msra.mxu0 %v242
    %1263 = vmatprep.subr.mxu0 %v247
    %1264 = vmatpush1.msra.mxu0 %v246
    %1265 = vmatprep.subr.mxu0 %v251
    %1266 = vmatpush1.msra.mxu0 %v250
    %1267 = vmatprep.subr.mxu0 %v255
    %1268 = vmatpush1.msra.mxu0 %v254
    %1269 = vmatprep.subr.mxu0 %v259
    %1270 = vmatpush1.msra.mxu0 %v258
    %1271 = vmatprep.subr.mxu0 %v263
    %1272 = vmatpush1.msra.mxu0 %v262
    %1273 = vmatprep.subr.mxu0 %v267
    %1274 = vmatpush1.msra.mxu0 %v266
    %1275 = vmatprep.subr.mxu0 %v271
    %1276 = vmatpush1.msra.mxu0 %v270
    %1277 = vmatprep.subr.mxu0 %v275
    %1278 = vmatpush1.msra.mxu0 %v274
    %1279 = vmatprep.subr.mxu0 %v279
    %1280 = vmatpush1.msra.mxu0 %v278
    %1281 = vmatprep.subr.mxu0 %v283
    %1282 = vmatpush1.msra.mxu0 %v282
    %1283 = vmatprep.subr.mxu0 %v287
    %1284 = vmatpush1.msra.mxu0 %v286
    %1285 = vmatprep.subr.mxu0 %v291
    %1286 = vmatpush1.msra.mxu0 %v290
    %1287 = vmatprep.subr.mxu0 %v295
    %1288 = vmatpush1.msra.mxu0 %v294
    %1289 = vmatprep.subr.mxu0 %v299
    %1290 = vmatpush1.msra.mxu0 %v298
    %1291 = vmatprep.subr.mxu0 0.0
    %1292 = vmatpush1.msra.mxu0 0.0
    %1293 = vmatprep.subr.mxu0 0.0
    %1294 = vmatpush1.msra.mxu0 0.0
    %1295 = vmatprep.subr.mxu0 0.0
    %1296 = vmatpush1.msra.mxu0 0.0
    %1297 = vmatprep.subr.mxu0 0.0
    %1298 = vmatpush1.msra.mxu0 0.0
    %1299 = vmatprep.subr.mxu0 0.0
    %1300 = vmatpush1.msra.mxu0 0.0
    %1301 = vmatprep.subr.mxu0 0.0
    %1302 = vmatpush1.msra.mxu0 0.0
    %1303 = vmatprep.subr.mxu0 0.0
    %1304 = vmatpush1.msra.mxu0 0.0
    %1305 = vmatprep.subr.mxu0 0.0
    %1306 = vmatpush1.msra.mxu0 0.0
    %1307 = vmatprep.subr.mxu0 0.0
    %1308 = vmatpush1.msra.mxu0 0.0
    %1309 = vmatprep.subr.mxu0 0.0
    %1310 = vmatpush1.msra.mxu0 0.0
    %1311 = vmatprep.subr.mxu0 0.0
    %1312 = vmatpush1.msra.mxu0 0.0
    %1313 = vmatprep.subr.mxu0 0.0
    %1314 = vmatpush1.msra.mxu0 0.0
    %1315 = vmatprep.subr.mxu0 0.0
    %1316 = vmatpush1.msra.mxu0 0.0
    %1317 = vmatprep.subr.mxu0 0.0
    %1318 = vmatpush1.msra.mxu0 0.0
    %1319 = vmatprep.subr.mxu0 0.0
    %1320 = vmatpush1.msra.mxu0 0.0
    %1321 = vmatprep.subr.mxu0 0.0
    %1322 = vmatpush1.msra.mxu0 0.0
    %1323 = vmatprep.mubr.f32.mxu0 0.0
    %1324 = vmatmul.mubr.f32.gmra.mrb[0].mxu0 %v1257
    %v1325 = vpop.f32.mrb[0].mxu0
    %v1326 = vadd.f32 0.0, %v1325
    %v1327 = vpop.f32.mrb[0].mxu0
    %v1328 = vadd.f32 0.0, %v1327
    %1329 = vdwg.mxu0
    %1330 = vmatprep.subr.mxu0 %v241
    %1331 = vmatpush1.msra.mxu0 %v240
    %1332 = vmatprep.subr.mxu0 %v245
    %1333 = vmatpush1.msra.mxu0 %v244
    %1334 = vmatprep.subr.mxu0 %v249
    %1335 = vmatpush1.msra.mxu0 %v248
    %1336 = vmatprep.subr.mxu0 %v253
    %1337 = vmatpush1.msra.mxu0 %v252
    %1338 = vmatprep.subr.mxu0 %v257
    %1339 = vmatpush1.msra.mxu0 %v256
    %1340 = vmatprep.subr.mxu0 %v261
    %1341 = vmatpush1.msra.mxu0 %v260
    %1342 = vmatprep.subr.mxu0 %v265
    %1343 = vmatpush1.msra.mxu0 %v264
    %1344 = vmatprep.subr.mxu0 %v269
    %1345 = vmatpush1.msra.mxu0 %v268
    %1346 = vmatprep.subr.mxu0 %v273
    %1347 = vmatpush1.msra.mxu0 %v272
    %1348 = vmatprep.subr.mxu0 %v277
    %1349 = vmatpush1.msra.mxu0 %v276
    %1350 = vmatprep.subr.mxu0 %v281
    %1351 = vmatpush1.msra.mxu0 %v280
    %1352 = vmatprep.subr.mxu0 %v285
    %1353 = vmatpush1.msra.mxu0 %v284
    %1354 = vmatprep.subr.mxu0 %v289
    %1355 = vmatpush1.msra.mxu0 %v288
    %1356 = vmatprep.subr.mxu0 %v293
    %1357 = vmatpush1.msra.mxu0 %v292
    %1358 = vmatprep.subr.mxu0 %v297
    %1359 = vmatpush1.msra.mxu0 %v296
    %1360 = vmatprep.subr.mxu0 %v301
    %1361 = vmatpush1.msra.mxu0 %v300
    %1362 = vmatprep.subr.mxu0 0.0
    %1363 = vmatpush1.msra.mxu0 0.0
    %1364 = vmatprep.subr.mxu0 0.0
    %1365 = vmatpush1.msra.mxu0 0.0
    %1366 = vmatprep.subr.mxu0 0.0
    %1367 = vmatpush1.msra.mxu0 0.0
    %1368 = vmatprep.subr.mxu0 0.0
    %1369 = vmatpush1.msra.mxu0 0.0
    %1370 = vmatprep.subr.mxu0 0.0
    %1371 = vmatpush1.msra.mxu0 0.0
    %1372 = vmatprep.subr.mxu0 0.0
    %1373 = vmatpush1.msra.mxu0 0.0
    %1374 = vmatprep.subr.mxu0 0.0
    %1375 = vmatpush1.msra.mxu0 0.0
    %1376 = vmatprep.subr.mxu0 0.0
    %1377 = vmatpush1.msra.mxu0 0.0
    %1378 = vmatprep.subr.mxu0 0.0
    %1379 = vmatpush1.msra.mxu0 0.0
    %1380 = vmatprep.subr.mxu0 0.0
    %1381 = vmatpush1.msra.mxu0 0.0
    %1382 = vmatprep.subr.mxu0 0.0
    %1383 = vmatpush1.msra.mxu0 0.0
    %1384 = vmatprep.subr.mxu0 0.0
    %1385 = vmatpush1.msra.mxu0 0.0
    %1386 = vmatprep.subr.mxu0 0.0
    %1387 = vmatpush1.msra.mxu0 0.0
    %1388 = vmatprep.subr.mxu0 0.0
    %1389 = vmatpush1.msra.mxu0 0.0
    %1390 = vmatprep.subr.mxu0 0.0
    %1391 = vmatpush1.msra.mxu0 0.0
    %1392 = vmatprep.subr.mxu0 0.0
    %1393 = vmatpush1.msra.mxu0 0.0
    %1394 = vmatprep.mubr.f32.mxu0 0.0
    %1395 = vmatmul.mubr.f32.gmra.mrb[0].mxu0 %v1257
    %v1396 = vpop.f32.mrb[0].mxu0
    %v1397 = vadd.f32 0.0, %v1396
    %v1398 = vpop.f32.mrb[0].mxu0
    %v1399 = vadd.f32 0.0, %v1398
    %1400 = vdwg.mxu0
    %v1405 = vrot.slane %v1326, 3
    %v1406 = vrot.slane %v1328, 3
    %v1407 = vrot.slane %v1397, 3
    %v1408 = vrot.slane %v1399, 3
    %v1413 = vadd.f32 %v163, %v1405
    %v1414 = vadd.f32 %v165, %v1406
    %v1415 = vadd.f32 %v234, %v1407
    %v1416 = vadd.f32 %v236, %v1408
    %v1417 = vxor.u32 %v1413, 2147483648
    %v1418 = vxor.u32 %v1414, 2147483648
    %v1419 = vxor.u32 %v1415, 2147483648
    %v1420 = vxor.u32 %v1416, 2147483648
    %v1421 = vmul.f32 %v1417, 1.442695
    %v1422 = vpow.pop %v1421
    %v1423 = vmul.f32 %v1418, 1.442695
    %v1424 = vpow.pop %v1423
    %v1425 = vmul.f32 %v1419, 1.442695
    %v1426 = vpow.pop %v1425
    %v1427 = vmul.f32 %v1420, 1.442695
    %v1428 = vpow.pop %v1427
    %v1429 = vadd.f32 %v1422, 1.0
    %v1430 = vadd.f32 %v1424, 1.0
    %v1431 = vadd.f32 %v1426, 1.0
    %v1432 = vadd.f32 %v1428, 1.0
    %v1433 = vrcp.pop %v1429
    %v1434 = vmul.f32 1.0, %v1433
    %v1435 = vrcp.pop %v1430
    %v1436 = vmul.f32 1.0, %v1435
    %v1437 = vrcp.pop %v1431
    %v1438 = vmul.f32 1.0, %v1437
    %v1439 = vrcp.pop %v1432
    %v1440 = vmul.f32 1.0, %v1439
    %v1441 = vmul.f32 %v1438, 2.0
    %v1442 = vsub.f32 %v1441, 1.0
    %v1444 = vrot.slane %v1253, 7
    %v1446 = vmul.f32 %v1436, %v1444
    %v1447 = vmul.f32 %v1434, %v1442
    %v1448 = vadd.f32 %v1446, %v1447
    %v1449 = vtanh.pop %v1448
    %v1450 = vmul.f32 %v1440, %v1449
    %v1452 = vrot.slane %v1450, 5
    %1454 = vmatprep.subr.mxu0 %v239
    %1455 = vmatpush1.msra.mxu0 %v238
    %1456 = vmatprep.subr.mxu0 %v243
    %1457 = vmatpush1.msra.mxu0 %v242
    %1458 = vmatprep.subr.mxu0 %v247
    %1459 = vmatpush1.msra.mxu0 %v246
    %1460 = vmatprep.subr.mxu0 %v251
    %1461 = vmatpush1.msra.mxu0 %v250
    %1462 = vmatprep.subr.mxu0 %v255
    %1463 = vmatpush1.msra.mxu0 %v254
    %1464 = vmatprep.subr.mxu0 %v259
    %1465 = vmatpush1.msra.mxu0 %v258
    %1466 = vmatprep.subr.mxu0 %v263
    %1467 = vmatpush1.msra.mxu0 %v262
    %1468 = vmatprep.subr.mxu0 %v267
    %1469 = vmatpush1.msra.mxu0 %v266
    %1470 = vmatprep.subr.mxu0 %v271
    %1471 = vmatpush1.msra.mxu0 %v270
    %1472 = vmatprep.subr.mxu0 %v275
    %1473 = vmatpush1.msra.mxu0 %v274
    %1474 = vmatprep.subr.mxu0 %v279
    %1475 = vmatpush1.msra.mxu0 %v278
    %1476 = vmatprep.subr.mxu0 %v283
    %1477 = vmatpush1.msra.mxu0 %v282
    %1478 = vmatprep.subr.mxu0 %v287
    %1479 = vmatpush1.msra.mxu0 %v286
    %1480 = vmatprep.subr.mxu0 %v291
    %1481 = vmatpush1.msra.mxu0 %v290
    %1482 = vmatprep.subr.mxu0 %v295
    %1483 = vmatpush1.msra.mxu0 %v294
    %1484 = vmatprep.subr.mxu0 %v299
    %1485 = vmatpush1.msra.mxu0 %v298
    %1486 = vmatprep.subr.mxu0 0.0
    %1487 = vmatpush1.msra.mxu0 0.0
    %1488 = vmatprep.subr.mxu0 0.0
    %1489 = vmatpush1.msra.mxu0 0.0
    %1490 = vmatprep.subr.mxu0 0.0
    %1491 = vmatpush1.msra.mxu0 0.0
    %1492 = vmatprep.subr.mxu0 0.0
    %1493 = vmatpush1.msra.mxu0 0.0
    %1494 = vmatprep.subr.mxu0 0.0
    %1495 = vmatpush1.msra.mxu0 0.0
    %1496 = vmatprep.subr.mxu0 0.0
    %1497 = vmatpush1.msra.mxu0 0.0
    %1498 = vmatprep.subr.mxu0 0.0
    %1499 = vmatpush1.msra.mxu0 0.0
    %1500 = vmatprep.subr.mxu0 0.0
    %1501 = vmatpush1.msra.mxu0 0.0
    %1502 = vmatprep.subr.mxu0 0.0
    %1503 = vmatpush1.msra.mxu0 0.0
    %1504 = vmatprep.subr.mxu0 0.0
    %1505 = vmatpush1.msra.mxu0 0.0
    %1506 = vmatprep.subr.mxu0 0.0
    %1507 = vmatpush1.msra.mxu0 0.0
    %1508 = vmatprep.subr.mxu0 0.0
    %1509 = vmatpush1.msra.mxu0 0.0
    %1510 = vmatprep.subr.mxu0 0.0
    %1511 = vmatpush1.msra.mxu0 0.0
    %1512 = vmatprep.subr.mxu0 0.0
    %1513 = vmatpush1.msra.mxu0 0.0
    %1514 = vmatprep.subr.mxu0 0.0
    %1515 = vmatpush1.msra.mxu0 0.0
    %1516 = vmatprep.subr.mxu0 0.0
    %1517 = vmatpush1.msra.mxu0 0.0
    %1518 = vmatprep.mubr.f32.mxu0 0.0
    %1519 = vmatmul.mubr.f32.gmra.mrb[0].mxu0 %v1452
    %v1520 = vpop.f32.mrb[0].mxu0
    %v1521 = vadd.f32 0.0, %v1520
    %v1522 = vpop.f32.mrb[0].mxu0
    %v1523 = vadd.f32 0.0, %v1522
    %1524 = vdwg.mxu0
    %1525 = vmatprep.subr.mxu0 %v241
    %1526 = vmatpush1.msra.mxu0 %v240
    %1527 = vmatprep.subr.mxu0 %v245
    %1528 = vmatpush1.msra.mxu0 %v244
    %1529 = vmatprep.subr.mxu0 %v249
    %1530 = vmatpush1.msra.mxu0 %v248
    %1531 = vmatprep.subr.mxu0 %v253
    %1532 = vmatpush1.msra.mxu0 %v252
    %1533 = vmatprep.subr.mxu0 %v257
    %1534 = vmatpush1.msra.mxu0 %v256
    %1535 = vmatprep.subr.mxu0 %v261
    %1536 = vmatpush1.msra.mxu0 %v260
    %1537 = vmatprep.subr.mxu0 %v265
    %1538 = vmatpush1.msra.mxu0 %v264
    %1539 = vmatprep.subr.mxu0 %v269
    %1540 = vmatpush1.msra.mxu0 %v268
    %1541 = vmatprep.subr.mxu0 %v273
    %1542 = vmatpush1.msra.mxu0 %v272
    %1543 = vmatprep.subr.mxu0 %v277
    %1544 = vmatpush1.msra.mxu0 %v276
    %1545 = vmatprep.subr.mxu0 %v281
    %1546 = vmatpush1.msra.mxu0 %v280
    %1547 = vmatprep.subr.mxu0 %v285
    %1548 = vmatpush1.msra.mxu0 %v284
    %1549 = vmatprep.subr.mxu0 %v289
    %1550 = vmatpush1.msra.mxu0 %v288
    %1551 = vmatprep.subr.mxu0 %v293
    %1552 = vmatpush1.msra.mxu0 %v292
    %1553 = vmatprep.subr.mxu0 %v297
    %1554 = vmatpush1.msra.mxu0 %v296
    %1555 = vmatprep.subr.mxu0 %v301
    %1556 = vmatpush1.msra.mxu0 %v300
    %1557 = vmatprep.subr.mxu0 0.0
    %1558 = vmatpush1.msra.mxu0 0.0
    %1559 = vmatprep.subr.mxu0 0.0
    %1560 = vmatpush1.msra.mxu0 0.0
    %1561 = vmatprep.subr.mxu0 0.0
    %1562 = vmatpush1.msra.mxu0 0.0
    %1563 = vmatprep.subr.mxu0 0.0
    %1564 = vmatpush1.msra.mxu0 0.0
    %1565 = vmatprep.subr.mxu0 0.0
    %1566 = vmatpush1.msra.mxu0 0.0
    %1567 = vmatprep.subr.mxu0 0.0
    %1568 = vmatpush1.msra.mxu0 0.0
    %1569 = vmatprep.subr.mxu0 0.0
    %1570 = vmatpush1.msra.mxu0 0.0
    %1571 = vmatprep.subr.mxu0 0.0
    %1572 = vmatpush1.msra.mxu0 0.0
    %1573 = vmatprep.subr.mxu0 0.0
    %1574 = vmatpush1.msra.mxu0 0.0
    %1575 = vmatprep.subr.mxu0 0.0
    %1576 = vmatpush1.msra.mxu0 0.0
    %1577 = vmatprep.subr.mxu0 0.0
    %1578 = vmatpush1.msra.mxu0 0.0
    %1579 = vmatprep.subr.mxu0 0.0
    %1580 = vmatpush1.msra.mxu0 0.0
    %1581 = vmatprep.subr.mxu0 0.0
    %1582 = vmatpush1.msra.mxu0 0.0
    %1583 = vmatprep.subr.mxu0 0.0
    %1584 = vmatpush1.msra.mxu0 0.0
    %1585 = vmatprep.subr.mxu0 0.0
    %1586 = vmatpush1.msra.mxu0 0.0
    %1587 = vmatprep.subr.mxu0 0.0
    %1588 = vmatpush1.msra.mxu0 0.0
    %1589 = vmatprep.mubr.f32.mxu0 0.0
    %1590 = vmatmul.mubr.f32.gmra.mrb[0].mxu0 %v1452
    %v1591 = vpop.f32.mrb[0].mxu0
    %v1592 = vadd.f32 0.0, %v1591
    %v1593 = vpop.f32.mrb[0].mxu0
    %v1594 = vadd.f32 0.0, %v1593
    %1595 = vdwg.mxu0
    %v1600 = vrot.slane %v1521, 2
    %v1601 = vrot.slane %v1523, 2
    %v1602 = vrot.slane %v1592, 2
    %v1603 = vrot.slane %v1594, 2
    %v1608 = vadd.f32 %v163, %v1600
    %v1609 = vadd.f32 %v165, %v1601
    %v1610 = vadd.f32 %v234, %v1602
    %v1611 = vadd.f32 %v236, %v1603
    %v1612 = vxor.u32 %v1608, 2147483648
    %v1613 = vxor.u32 %v1609, 2147483648
    %v1614 = vxor.u32 %v1610, 2147483648
    %v1615 = vxor.u32 %v1611, 2147483648
    %v1616 = vmul.f32 %v1612, 1.442695
    %v1617 = vpow.pop %v1616
    %v1618 = vmul.f32 %v1613, 1.442695
    %v1619 = vpow.pop %v1618
    %v1620 = vmul.f32 %v1614, 1.442695
    %v1621 = vpow.pop %v1620
    %v1622 = vmul.f32 %v1615, 1.442695
    %v1623 = vpow.pop %v1622
    %v1624 = vadd.f32 %v1617, 1.0
    %v1625 = vadd.f32 %v1619, 1.0
    %v1626 = vadd.f32 %v1621, 1.0
    %v1627 = vadd.f32 %v1623, 1.0
    %v1628 = vrcp.pop %v1624
    %v1629 = vmul.f32 1.0, %v1628
    %v1630 = vrcp.pop %v1625
    %v1631 = vmul.f32 1.0, %v1630
    %v1632 = vrcp.pop %v1626
    %v1633 = vmul.f32 1.0, %v1632
    %v1634 = vrcp.pop %v1627
    %v1635 = vmul.f32 1.0, %v1634
    %v1636 = vmul.f32 %v1633, 2.0
    %v1637 = vsub.f32 %v1636, 1.0
    %v1639 = vrot.slane %v1448, 7
    %v1641 = vmul.f32 %v1631, %v1639
    %v1642 = vmul.f32 %v1629, %v1637
    %v1643 = vadd.f32 %v1641, %v1642
    %v1644 = vtanh.pop %v1643
    %v1645 = vmul.f32 %v1635, %v1644
    %v1647 = vrot.slane %v1645, 6
    %1649 = vmatprep.subr.mxu0 %v239
    %1650 = vmatpush1.msra.mxu0 %v238
    %1651 = vmatprep.subr.mxu0 %v243
    %1652 = vmatpush1.msra.mxu0 %v242
    %1653 = vmatprep.subr.mxu0 %v247
    %1654 = vmatpush1.msra.mxu0 %v246
    %1655 = vmatprep.subr.mxu0 %v251
    %1656 = vmatpush1.msra.mxu0 %v250
    %1657 = vmatprep.subr.mxu0 %v255
    %1658 = vmatpush1.msra.mxu0 %v254
    %1659 = vmatprep.subr.mxu0 %v259
    %1660 = vmatpush1.msra.mxu0 %v258
    %1661 = vmatprep.subr.mxu0 %v263
    %1662 = vmatpush1.msra.mxu0 %v262
    %1663 = vmatprep.subr.mxu0 %v267
    %1664 = vmatpush1.msra.mxu0 %v266
    %1665 = vmatprep.subr.mxu0 %v271
    %1666 = vmatpush1.msra.mxu0 %v270
    %1667 = vmatprep.subr.mxu0 %v275
    %1668 = vmatpush1.msra.mxu0 %v274
    %1669 = vmatprep.subr.mxu0 %v279
    %1670 = vmatpush1.msra.mxu0 %v278
    %1671 = vmatprep.subr.mxu0 %v283
    %1672 = vmatpush1.msra.mxu0 %v282
    %1673 = vmatprep.subr.mxu0 %v287
    %1674 = vmatpush1.msra.mxu0 %v286
    %1675 = vmatprep.subr.mxu0 %v291
    %1676 = vmatpush1.msra.mxu0 %v290
    %1677 = vmatprep.subr.mxu0 %v295
    %1678 = vmatpush1.msra.mxu0 %v294
    %1679 = vmatprep.subr.mxu0 %v299
    %1680 = vmatpush1.msra.mxu0 %v298
    %1681 = vmatprep.subr.mxu0 0.0
    %1682 = vmatpush1.msra.mxu0 0.0
    %1683 = vmatprep.subr.mxu0 0.0
    %1684 = vmatpush1.msra.mxu0 0.0
    %1685 = vmatprep.subr.mxu0 0.0
    %1686 = vmatpush1.msra.mxu0 0.0
    %1687 = vmatprep.subr.mxu0 0.0
    %1688 = vmatpush1.msra.mxu0 0.0
    %1689 = vmatprep.subr.mxu0 0.0
    %1690 = vmatpush1.msra.mxu0 0.0
    %1691 = vmatprep.subr.mxu0 0.0
    %1692 = vmatpush1.msra.mxu0 0.0
    %1693 = vmatprep.subr.mxu0 0.0
    %1694 = vmatpush1.msra.mxu0 0.0
    %1695 = vmatprep.subr.mxu0 0.0
    %1696 = vmatpush1.msra.mxu0 0.0
    %1697 = vmatprep.subr.mxu0 0.0
    %1698 = vmatpush1.msra.mxu0 0.0
    %1699 = vmatprep.subr.mxu0 0.0
    %1700 = vmatpush1.msra.mxu0 0.0
    %1701 = vmatprep.subr.mxu0 0.0
    %1702 = vmatpush1.msra.mxu0 0.0
    %1703 = vmatprep.subr.mxu0 0.0
    %1704 = vmatpush1.msra.mxu0 0.0
    %1705 = vmatprep.subr.mxu0 0.0
    %1706 = vmatpush1.msra.mxu0 0.0
    %1707 = vmatprep.subr.mxu0 0.0
    %1708 = vmatpush1.msra.mxu0 0.0
    %1709 = vmatprep.subr.mxu0 0.0
    %1710 = vmatpush1.msra.mxu0 0.0
    %1711 = vmatprep.subr.mxu0 0.0
    %1712 = vmatpush1.msra.mxu0 0.0
    %1713 = vmatprep.mubr.f32.mxu0 0.0
    %1714 = vmatmul.mubr.f32.gmra.mrb[0].mxu0 %v1647
    %v1715 = vpop.f32.mrb[0].mxu0
    %v1716 = vadd.f32 0.0, %v1715
    %v1717 = vpop.f32.mrb[0].mxu0
    %v1718 = vadd.f32 0.0, %v1717
    %1719 = vdwg.mxu0
    %1720 = vmatprep.subr.mxu0 %v241
    %1721 = vmatpush1.msra.mxu0 %v240
    %1722 = vmatprep.subr.mxu0 %v245
    %1723 = vmatpush1.msra.mxu0 %v244
    %1724 = vmatprep.subr.mxu0 %v249
    %1725 = vmatpush1.msra.mxu0 %v248
    %1726 = vmatprep.subr.mxu0 %v253
    %1727 = vmatpush1.msra.mxu0 %v252
    %1728 = vmatprep.subr.mxu0 %v257
    %1729 = vmatpush1.msra.mxu0 %v256
    %1730 = vmatprep.subr.mxu0 %v261
    %1731 = vmatpush1.msra.mxu0 %v260
    %1732 = vmatprep.subr.mxu0 %v265
    %1733 = vmatpush1.msra.mxu0 %v264
    %1734 = vmatprep.subr.mxu0 %v269
    %1735 = vmatpush1.msra.mxu0 %v268
    %1736 = vmatprep.subr.mxu0 %v273
    %1737 = vmatpush1.msra.mxu0 %v272
    %1738 = vmatprep.subr.mxu0 %v277
    %1739 = vmatpush1.msra.mxu0 %v276
    %1740 = vmatprep.subr.mxu0 %v281
    %1741 = vmatpush1.msra.mxu0 %v280
    %1742 = vmatprep.subr.mxu0 %v285
    %1743 = vmatpush1.msra.mxu0 %v284
    %1744 = vmatprep.subr.mxu0 %v289
    %1745 = vmatpush1.msra.mxu0 %v288
    %1746 = vmatprep.subr.mxu0 %v293
    %1747 = vmatpush1.msra.mxu0 %v292
    %1748 = vmatprep.subr.mxu0 %v297
    %1749 = vmatpush1.msra.mxu0 %v296
    %1750 = vmatprep.subr.mxu0 %v301
    %1751 = vmatpush1.msra.mxu0 %v300
    %1752 = vmatprep.subr.mxu0 0.0
    %1753 = vmatpush1.msra.mxu0 0.0
    %1754 = vmatprep.subr.mxu0 0.0
    %1755 = vmatpush1.msra.mxu0 0.0
    %1756 = vmatprep.subr.mxu0 0.0
    %1757 = vmatpush1.msra.mxu0 0.0
    %1758 = vmatprep.subr.mxu0 0.0
    %1759 = vmatpush1.msra.mxu0 0.0
    %1760 = vmatprep.subr.mxu0 0.0
    %1761 = vmatpush1.msra.mxu0 0.0
    %1762 = vmatprep.subr.mxu0 0.0
    %1763 = vmatpush1.msra.mxu0 0.0
    %1764 = vmatprep.subr.mxu0 0.0
    %1765 = vmatpush1.msra.mxu0 0.0
    %1766 = vmatprep.subr.mxu0 0.0
    %1767 = vmatpush1.msra.mxu0 0.0
    %1768 = vmatprep.subr.mxu0 0.0
    %1769 = vmatpush1.msra.mxu0 0.0
    %1770 = vmatprep.subr.mxu0 0.0
    %1771 = vmatpush1.msra.mxu0 0.0
    %1772 = vmatprep.subr.mxu0 0.0
    %1773 = vmatpush1.msra.mxu0 0.0
    %1774 = vmatprep.subr.mxu0 0.0
    %1775 = vmatpush1.msra.mxu0 0.0
    %1776 = vmatprep.subr.mxu0 0.0
    %1777 = vmatpush1.msra.mxu0 0.0
    %1778 = vmatprep.subr.mxu0 0.0
    %1779 = vmatpush1.msra.mxu0 0.0
    %1780 = vmatprep.subr.mxu0 0.0
    %1781 = vmatpush1.msra.mxu0 0.0
    %1782 = vmatprep.subr.mxu0 0.0
    %1783 = vmatpush1.msra.mxu0 0.0
    %1784 = vmatprep.mubr.f32.mxu0 0.0
    %1785 = vmatmul.mubr.f32.gmra.mrb[0].mxu0 %v1647
    %v1786 = vpop.f32.mrb[0].mxu0
    %v1787 = vadd.f32 0.0, %v1786
    %v1788 = vpop.f32.mrb[0].mxu0
    %v1789 = vadd.f32 0.0, %v1788
    %1790 = vdwg.mxu0
    %v1795 = vrot.slane %v1716, 1
    %v1796 = vrot.slane %v1718, 1
    %v1797 = vrot.slane %v1787, 1
    %v1798 = vrot.slane %v1789, 1
    %v1803 = vadd.f32 %v163, %v1795
    %v1804 = vadd.f32 %v165, %v1796
    %v1805 = vadd.f32 %v234, %v1797
    %v1806 = vadd.f32 %v236, %v1798
    %v1807 = vxor.u32 %v1803, 2147483648
    %v1808 = vxor.u32 %v1804, 2147483648
    %v1809 = vxor.u32 %v1805, 2147483648
    %v1810 = vxor.u32 %v1806, 2147483648
    %v1811 = vmul.f32 %v1807, 1.442695
    %v1812 = vpow.pop %v1811
    %v1813 = vmul.f32 %v1808, 1.442695
    %v1814 = vpow.pop %v1813
    %v1815 = vmul.f32 %v1809, 1.442695
    %v1816 = vpow.pop %v1815
    %v1817 = vmul.f32 %v1810, 1.442695
    %v1818 = vpow.pop %v1817
    %v1819 = vadd.f32 %v1812, 1.0
    %v1820 = vadd.f32 %v1814, 1.0
    %v1821 = vadd.f32 %v1816, 1.0
    %v1822 = vadd.f32 %v1818, 1.0
    %v1823 = vrcp.pop %v1819
    %v1824 = vmul.f32 1.0, %v1823
    %v1825 = vrcp.pop %v1820
    %v1826 = vmul.f32 1.0, %v1825
    %v1827 = vrcp.pop %v1821
    %v1828 = vmul.f32 1.0, %v1827
    %v1829 = vrcp.pop %v1822
    %v1830 = vmul.f32 1.0, %v1829
    %v1831 = vmul.f32 %v1828, 2.0
    %v1832 = vsub.f32 %v1831, 1.0
    %v1834 = vrot.slane %v1643, 7
    %v1836 = vmul.f32 %v1826, %v1834
    %v1837 = vmul.f32 %v1824, %v1832
    %v1838 = vadd.f32 %v1836, %v1837
    %v1839 = vtanh.pop %v1838
    %v1840 = vmul.f32 %v1830, %v1839
    %v1841 = vld [vmem:[%s4] sm:$0xff]
    %v1842 = vld [vmem:[%s4 + $0x8] sm:$0xff]
    %v1843 = vld [vmem:[%s4 + $0x10] sm:$0xff]
    %v1844 = vld [vmem:[%s4 + $0x18] sm:$0xff]
    %v1845 = vld [vmem:[%s4 + $0x20] sm:$0xff]
    %v1846 = vld [vmem:[%s4 + $0x28] sm:$0xff]
    %v1847 = vld [vmem:[%s4 + $0x30] sm:$0xff]
    %v1848 = vld [vmem:[%s4 + $0x38] sm:$0xff]
    %v1849 = vld [vmem:[%s4 + $0x40] sm:$0xff]
    %v1850 = vld [vmem:[%s4 + $0x48] sm:$0xff]
    %v1851 = vld [vmem:[%s4 + $0x50] sm:$0xff]
    %v1852 = vld [vmem:[%s4 + $0x58] sm:$0xff]
    %v1853 = vld [vmem:[%s4 + $0x60] sm:$0xff]
    %v1854 = vld [vmem:[%s4 + $0x68] sm:$0xff]
    %v1855 = vld [vmem:[%s4 + $0x70] sm:$0xff]
    %v1856 = vld [vmem:[%s4 + $0x78] sm:$0xff]
    %v1857 = vld [vmem:[%s5] sm:$0x1]
    %v1859 = vrot.slane %v1840, 7
    %1861 = vmatprep.subr.mxu0 0.0
    %1862 = vmatpush1.msra.mxu0 %v1841
    %1863 = vmatprep.subr.mxu0 0.0
    %1864 = vmatpush1.msra.mxu0 %v1842
    %1865 = vmatprep.subr.mxu0 0.0
    %1866 = vmatpush1.msra.mxu0 %v1843
    %1867 = vmatprep.subr.mxu0 0.0
    %1868 = vmatpush1.msra.mxu0 %v1844
    %1869 = vmatprep.subr.mxu0 0.0
    %1870 = vmatpush1.msra.mxu0 %v1845
    %1871 = vmatprep.subr.mxu0 0.0
    %1872 = vmatpush1.msra.mxu0 %v1846
    %1873 = vmatprep.subr.mxu0 0.0
    %1874 = vmatpush1.msra.mxu0 %v1847
    %1875 = vmatprep.subr.mxu0 0.0
    %1876 = vmatpush1.msra.mxu0 %v1848
    %1877 = vmatprep.subr.mxu0 0.0
    %1878 = vmatpush1.msra.mxu0 %v1849
    %1879 = vmatprep.subr.mxu0 0.0
    %1880 = vmatpush1.msra.mxu0 %v1850
    %1881 = vmatprep.subr.mxu0 0.0
    %1882 = vmatpush1.msra.mxu0 %v1851
    %1883 = vmatprep.subr.mxu0 0.0
    %1884 = vmatpush1.msra.mxu0 %v1852
    %1885 = vmatprep.subr.mxu0 0.0
    %1886 = vmatpush1.msra.mxu0 %v1853
    %1887 = vmatprep.subr.mxu0 0.0
    %1888 = vmatpush1.msra.mxu0 %v1854
    %1889 = vmatprep.subr.mxu0 0.0
    %1890 = vmatpush1.msra.mxu0 %v1855
    %1891 = vmatprep.subr.mxu0 0.0
    %1892 = vmatpush1.msra.mxu0 %v1856
    %1893 = vmatprep.subr.mxu0 0.0
    %1894 = vmatpush1.msra.mxu0 0.0
    %1895 = vmatprep.subr.mxu0 0.0
    %1896 = vmatpush1.msra.mxu0 0.0
    %1897 = vmatprep.subr.mxu0 0.0
    %1898 = vmatpush1.msra.mxu0 0.0
    %1899 = vmatprep.subr.mxu0 0.0
    %1900 = vmatpush1.msra.mxu0 0.0
    %1901 = vmatprep.subr.mxu0 0.0
    %1902 = vmatpush1.msra.mxu0 0.0
    %1903 = vmatprep.subr.mxu0 0.0
    %1904 = vmatpush1.msra.mxu0 0.0
    %1905 = vmatprep.subr.mxu0 0.0
    %1906 = vmatpush1.msra.mxu0 0.0
    %1907 = vmatprep.subr.mxu0 0.0
    %1908 = vmatpush1.msra.mxu0 0.0
    %1909 = vmatprep.subr.mxu0 0.0
    %1910 = vmatpush1.msra.mxu0 0.0
    %1911 = vmatprep.subr.mxu0 0.0
    %1912 = vmatpush1.msra.mxu0 0.0
    %1913 = vmatprep.subr.mxu0 0.0
    %1914 = vmatpush1.msra.mxu0 0.0
    %1915 = vmatprep.subr.mxu0 0.0
    %1916 = vmatpush1.msra.mxu0 0.0
    %1917 = vmatprep.subr.mxu0 0.0
    %1918 = vmatpush1.msra.mxu0 0.0
    %1919 = vmatprep.subr.mxu0 0.0
    %1920 = vmatpush1.msra.mxu0 0.0
    %1921 = vmatprep.subr.mxu0 0.0
    %1922 = vmatpush1.msra.mxu0 0.0
    %1923 = vmatprep.subr.mxu0 0.0
    %1924 = vmatpush1.msra.mxu0 0.0
    %1925 = vmatprep.mubr.f32.mxu0 0.0
    %1926 = vmatmul.mubr.f32.gmra.mrb[0].mxu0 %v1859
    %v1927 = vpop.f32.mrb[0].mxu0
    %v1928 = vadd.f32 %v1857, %v1927
    %v1929 = vpop.f32.mrb[0].mxu0
    %1930 = vdwg.mxu0
    %v1931 = vmax.f32 %v1928, 0.0
    %v1932 = vld [vmem:[%s6] sm:$0x1f]
    %v1933 = vld [vmem:[%s7] sm:$0x1]
    %vm1934 = vcmask 39936
    %v1936 = vsel %vm1934, %v1931, 0
    %vm1938 = vcmask 1044480
    %v1940 = vsel %vm1938, %v1932, 0
    %1942 = vmatprep.subr.mxu0 0.0
    %1943 = vmatpush1.msra.mxu0 %v1940
    %1944 = vmatprep.subr.mxu0 0.0
    %1945 = vmatpush1.msra.mxu0 0.0
    %1946 = vmatprep.subr.mxu0 0.0
    %1947 = vmatpush1.msra.mxu0 0.0
    %1948 = vmatprep.subr.mxu0 0.0
    %1949 = vmatpush1.msra.mxu0 0.0
    %1950 = vmatprep.subr.mxu0 0.0
    %1951 = vmatpush1.msra.mxu0 0.0
    %1952 = vmatprep.subr.mxu0 0.0
    %1953 = vmatpush1.msra.mxu0 0.0
    %1954 = vmatprep.subr.mxu0 0.0
    %1955 = vmatpush1.msra.mxu0 0.0
    %1956 = vmatprep.subr.mxu0 0.0
    %1957 = vmatpush1.msra.mxu0 0.0
    %1958 = vmatprep.subr.mxu0 0.0
    %1959 = vmatpush1.msra.mxu0 0.0
    %1960 = vmatprep.subr.mxu0 0.0
    %1961 = vmatpush1.msra.mxu0 0.0
    %1962 = vmatprep.subr.mxu0 0.0
    %1963 = vmatpush1.msra.mxu0 0.0
    %1964 = vmatprep.subr.mxu0 0.0
    %1965 = vmatpush1.msra.mxu0 0.0
    %1966 = vmatprep.subr.mxu0 0.0
    %1967 = vmatpush1.msra.mxu0 0.0
    %1968 = vmatprep.subr.mxu0 0.0
    %1969 = vmatpush1.msra.mxu0 0.0
    %1970 = vmatprep.subr.mxu0 0.0
    %1971 = vmatpush1.msra.mxu0 0.0
    %1972 = vmatprep.subr.mxu0 0.0
    %1973 = vmatpush1.msra.mxu0 0.0
    %1974 = vmatprep.subr.mxu0 0.0
    %1975 = vmatpush1.msra.mxu0 0.0
    %1976 = vmatprep.subr.mxu0 0.0
    %1977 = vmatpush1.msra.mxu0 0.0
    %1978 = vmatprep.subr.mxu0 0.0
    %1979 = vmatpush1.msra.mxu0 0.0
    %1980 = vmatprep.subr.mxu0 0.0
    %1981 = vmatpush1.msra.mxu0 0.0
    %1982 = vmatprep.subr.mxu0 0.0
    %1983 = vmatpush1.msra.mxu0 0.0
    %1984 = vmatprep.subr.mxu0 0.0
    %1985 = vmatpush1.msra.mxu0 0.0
    %1986 = vmatprep.subr.mxu0 0.0
    %1987 = vmatpush1.msra.mxu0 0.0
    %1988 = vmatprep.subr.mxu0 0.0
    %1989 = vmatpush1.msra.mxu0 0.0
    %1990 = vmatprep.subr.mxu0 0.0
    %1991 = vmatpush1.msra.mxu0 0.0
    %1992 = vmatprep.subr.mxu0 0.0
    %1993 = vmatpush1.msra.mxu0 0.0
    %1994 = vmatprep.subr.mxu0 0.0
    %1995 = vmatpush1.msra.mxu0 0.0
    %1996 = vmatprep.subr.mxu0 0.0
    %1997 = vmatpush1.msra.mxu0 0.0
    %1998 = vmatprep.subr.mxu0 0.0
    %1999 = vmatpush1.msra.mxu0 0.0
    %2000 = vmatprep.subr.mxu0 0.0
    %2001 = vmatpush1.msra.mxu0 0.0
    %2002 = vmatprep.subr.mxu0 0.0
    %2003 = vmatpush1.msra.mxu0 0.0
    %2004 = vmatprep.subr.mxu0 0.0
    %2005 = vmatpush1.msra.mxu0 0.0
    %2006 = vmatprep.mubr.f32.mxu0 0.0
    %2007 = vmatmul.mubr.f32.gmra.mrb[0].mxu0 %v1936
    %v2008 = vpop.f32.mrb[0].mxu0
    %v2009 = vadd.f32 %v1933, %v2008
    %v2010 = vpop.f32.mrb[0].mxu0
    %2011 = vdwg.mxu0
    %v2012 = vmax.f32 %v2009, 0.0
    %v2013 = vld [vmem:[%s8] sm:$0x1]
    %v2014 = vmul.f32 %v2012, %v2013
    %vm2015 = vcmask 16384
    %v2016 = vsel %vm2015, %v2014, 0.0
    %2017 = vadd.xlane.f32.xlu0 %v2016
    %v2018 = vpop.xlane.xlu0 %2017
    %v2019 = vld [vmem:[#allocation2] sm:$0x1]
    %v2020 = vadd.f32 %v2018, %v2019
    %v2021 = vmax.f32 %v2020, 0.0
    %vm2022 = vcmask 0
    %2023 = vst.msk [vmem:[#allocation6] sm:$0x1] %vm2022, %v2021
    // Predicated region
    $region46: #{tpu_custom_call.1} parent=1 // pred_check
      _
    $region47: #{tpu_custom_call.1} parent=1 // pred_check_branch
      %2025 = sbr.rel (0) target = $region49
    $region48: #{tpu_custom_call.1} parent=1 // pred_region
      %s2027 = ssub.s32 16, 16
      %2028 = vsyncadd [#allocation5], %s2027
      %s2030 = sshll.u32 [#allocation6], 4
      %s2031 = int_to_ptr.vmem [resolvable:$true] %s2030
      %2033 = dma.vmem_to_hbm [thread:$0]  %s2031, 16, %s10, [#allocation5]
    $region49: #{tpu_custom_call.1} parent=1 // pred_fallthru
      _
    // Predicated region
    $region50: #{tpu_custom_call.1} parent=1 // pred_check
      _
    $region51: #{tpu_custom_call.1} parent=1 // pred_check_branch
      %2035 = sbr.rel (0) target = $region53
    $region52: #{tpu_custom_call.1} parent=1 // pred_region
      %2036 = dma.done [#allocation5], 16
    $region53: #{tpu_custom_call.1} parent=1 // pred_fallthru
      _
    %2037 = vsyncpa [#allocation4], 1
    %2038 = vsyncpa [#allocation5], 1

</llo_original>
